<compile_context>
chip_gen: v7x
topology: tpu7x:2x2x1
jax: 0.10.0
libtpu: 0.0.40
codegen_flags: <defaults>
</compile_context>

<pallas_src>
import functools
import math

import jax
import jax.numpy as jnp
from jax import lax
from jax.experimental import pallas as pl
from jax.experimental.pallas import tpu as pltpu

ROW_TILE = 512  # rows (B*S) per grid step for the linear kernels (v5e/v6e)


# ---------------------------------------------------------------------------
# Kernel 1: fused q/k/v projections (one launch, weights resident)
# ---------------------------------------------------------------------------
def qkv_kernel(xq_ref, xk_ref, xv_ref, w_ref, b_ref, q_ref, k_ref, v_ref):
    # xq/xk/xv: (TM, H) f32;  w: (3, H, H) bf16;  b: (3, 1, H) f32
    def proj(x_ref, i):
        x = x_ref[...].astype(jnp.bfloat16)              # bf16 MXU operand
        y = jnp.dot(x, w_ref[i], preferred_element_type=jnp.float32)
        return y + b_ref[i]

    q_ref[...] = proj(xq_ref, 0).astype(q_ref.dtype)
    k_ref[...] = proj(xk_ref, 1).astype(k_ref.dtype)
    v_ref[...] = proj(xv_ref, 2).astype(v_ref.dtype)


def pallas_qkv_proj(xq, xk, xv, w_qkv, b_qkv, *, row_tile=ROW_TILE):
    """xq/xk/xv: (N, H) f32; w_qkv: (3, H, H) bf16; b_qkv: (3, 1, H) f32."""
    n, h = xq.shape
    tm = min(row_tile, n)
    row_spec = pl.BlockSpec((tm, h), lambda i: (i, 0))
    out = jax.ShapeDtypeStruct((n, h), jnp.float32)
    return pl.pallas_call(
        qkv_kernel,
        out_shape=(out, out, out),
        grid=(pl.cdiv(n, tm),),
        in_specs=[
            row_spec, row_spec, row_spec,
            pl.BlockSpec((3, h, h), lambda i: (0, 0, 0)),   # weights resident
            pl.BlockSpec((3, 1, h), lambda i: (0, 0, 0)),   # biases resident
        ],
        out_specs=(row_spec, row_spec, row_spec),
        compiler_params=pltpu.CompilerParams(
            dimension_semantics=("parallel",)),
    )(xq, xk, xv, w_qkv, b_qkv)


# ---------------------------------------------------------------------------
# Kernel 2: attention for one batch element, all heads, lane-dense output
# ---------------------------------------------------------------------------
def attn_kernel(q_ref, k_ref, v_ref, madd_ref, o_ref, *, n_heads, dh, scale):
    # q/k/v/o refs: (1, S, H);  madd_ref: (1, 1, S) additive mask (0 or -1e9)
    madd = madd_ref[0]                              # (1, S), broadcast over q
    q_all = q_ref[0].astype(jnp.bfloat16)           # (S, H)
    k_all = k_ref[0].astype(jnp.bfloat16)
    v_all = v_ref[0].astype(jnp.bfloat16)

    outs = []
    for h in range(n_heads):                        # static unroll, small nH
        sl = slice(h * dh, (h + 1) * dh)
        q = q_all[:, sl]                            # (S, Dh)
        k = k_all[:, sl]
        v = v_all[:, sl]
        # q @ k^T without materializing a transpose of k.
        scores = lax.dot_general(q, k, (((1,), (1,)), ((), ())),
                                 preferred_element_type=jnp.float32)
        scores = scores * scale + madd              # additive key mask
        # Numerically stable softmax over keys.  (Fully-masked rows become a
        # uniform distribution, matching PyTorch's masked_fill + softmax.)
        s_max = jnp.max(scores, axis=-1, keepdims=True)
        p = jnp.exp(scores - s_max)
        p = p * pl.reciprocal(jnp.sum(p, axis=-1, keepdims=True), approx=True)
        # dropout(att_map) is identity at inference time.
        out = lax.dot_general(p.astype(jnp.bfloat16), v,
                              (((1,), (0,)), ((), ())),
                              preferred_element_type=jnp.float32)   # (S, Dh)
        outs.append(out)

    # Heads concatenated along the lane axis -> single lane-dense store; the
    # result is already in merged (B, S, H) layout (no HBM transpose needed).
    o_ref[0] = jnp.concatenate(outs, axis=-1).astype(o_ref.dtype)


def pallas_attention(q_p, k_p, v_p, mask_add, n_heads):
    """q_p/k_p/v_p: (B, S, H) f32, mask_add: (B, 1, S) f32 -> (B, S, H)."""
    B, S, H = q_p.shape
    dh = H // n_heads
    kern = functools.partial(attn_kernel, n_heads=n_heads, dh=dh,
                             scale=1.0 / math.sqrt(dh))
    bsh_spec = pl.BlockSpec((1, S, H), lambda b: (b, 0, 0))
    return pl.pallas_call(
        kern,
        out_shape=jax.ShapeDtypeStruct((B, S, H), jnp.float32),
        grid=(B,),
        in_specs=[
            bsh_spec, bsh_spec, bsh_spec,
            pl.BlockSpec((1, 1, S), lambda b: (b, 0, 0)),
        ],
        out_specs=bsh_spec,
        compiler_params=pltpu.CompilerParams(
            dimension_semantics=("parallel",)),
    )(q_p, k_p, v_p, mask_add)


# ---------------------------------------------------------------------------
# Kernel 3: row-tiled dense linear  y = x @ W + b  (merge projection)
# ---------------------------------------------------------------------------
def linear_kernel(x_ref, w_ref, b_ref, o_ref):
    x = x_ref[...].astype(jnp.bfloat16)             # (TM, H_in)
    y = jnp.dot(x, w_ref[...], preferred_element_type=jnp.float32)
    o_ref[...] = (y + b_ref[...]).astype(o_ref.dtype)


def pallas_linear(x2d, w, b, *, row_tile=ROW_TILE):
    """x2d: (N, H_in) f32, w: (H_in, H_out), b: (1, H_out) -> (N, H_out)."""
    n, h_in = x2d.shape
    h_out = w.shape[1]
    tm = min(row_tile, n)
    return pl.pallas_call(
        linear_kernel,
        out_shape=jax.ShapeDtypeStruct((n, h_out), jnp.float32),
        grid=(pl.cdiv(n, tm),),
        in_specs=[
            pl.BlockSpec((tm, h_in), lambda i: (i, 0)),
            pl.BlockSpec((h_in, h_out), lambda i: (0, 0)),   # weight resident
            pl.BlockSpec((1, h_out), lambda i: (0, 0)),      # bias resident
        ],
        out_specs=pl.BlockSpec((tm, h_out), lambda i: (i, 0)),
        compiler_params=pltpu.CompilerParams(
            dimension_semantics=("parallel",)),
    )(x2d, w.astype(jnp.bfloat16), b)


# ---------------------------------------------------------------------------
# MHAtt forward (glue in plain JAX, hot path in Pallas)
# ---------------------------------------------------------------------------
def mhatt_forward(params, v, k, q, mask, n_heads):
    B, S, H = q.shape

    # Fused weight/bias stacks for the single q/k/v projection launch.
    w_qkv = jnp.stack([params["q_w"], params["k_w"], params["v_w"]])
    w_qkv = w_qkv.astype(jnp.bfloat16)
    b_qkv = jnp.stack([params["q_b"], params["k_b"], params["v_b"]])

    q_p, k_p, v_p = pallas_qkv_proj(
        q.reshape(B * S, H), k.reshape(B * S, H), v.reshape(B * S, H),
        w_qkv, b_qkv)
    q_p = q_p.reshape(B, S, H)
    k_p = k_p.reshape(B, S, H)
    v_p = v_p.reshape(B, S, H)

    # Bool key-mask (B,1,1,S) (True == masked) -> additive mask (B,1,S).
    mask_add = jnp.where(mask.reshape(B, 1, S),
                         jnp.float32(-1000000000.0), jnp.float32(0.0))

    # Heads handled in-kernel; output already merged as (B, S, H).
    atted = pallas_attention(q_p, k_p, v_p, mask_add, n_heads)

    out = pallas_linear(atted.reshape(B * S, H),
                        params["merge_w"], params["merge_b"])
    return out.reshape(B, S, H)


def init_params(key, hid_dim):
    ks = jax.random.split(key, 8)
    scale = 1.0 / math.sqrt(hid_dim)

    def w(k_):
        return jax.random.uniform(k_, (hid_dim, hid_dim), jnp.float32,
                                  -scale, scale)

    def b(k_):
        return jax.random.uniform(k_, (1, hid_dim), jnp.float32, -scale, scale)

    return {
        "v_w": w(ks[0]), "v_b": b(ks[1]),
        "k_w": w(ks[2]), "k_b": b(ks[3]),
        "q_w": w(ks[4]), "q_b": b(ks[5]),
        "merge_w": w(ks[6]), "merge_b": b(ks[7]),
    }


if __name__ == "__main__":
    HID_DIM = 32
    N_HEADS = 4
    B, S = 2, 8

    key = jax.random.PRNGKey(0)
    k_par, k_v, k_k, k_q = jax.random.split(key, 4)

    params = init_params(k_par, HID_DIM)
    v_in = jax.random.normal(k_v, (B, S, HID_DIM), jnp.float32)
    k_in = jax.random.normal(k_k, (B, S, HID_DIM), jnp.float32)
    q_in = jax.random.normal(k_q, (B, S, HID_DIM), jnp.float32)

    # Boolean key-mask (True == masked): mask the last 2 keys of batch 1.
    mask = jnp.zeros((B, 1, 1, S), dtype=jnp.bool_)
    mask = mask.at[1, :, :, -2:].set(True)

    fwd = jax.jit(functools.partial(mhatt_forward, n_heads=N_HEADS))
    out = fwd(params, v_in, k_in, q_in, mask)
    jax.block_until_ready(out)

    assert out.shape == (B, S, HID_DIM)
    assert jnp.all(jnp.isfinite(out))
    print("KERNEL_OK")
</pallas_src>

<mosaic_0001>
module attributes {stable_mosaic.version = 11 : i64} {
  func.func @linear_kernel(%arg0: i32, %arg1: memref<16x32xf32, #tpu.memory_space<vmem>>, %arg2: memref<32x32xbf16, #tpu.memory_space<vmem>>, %arg3: memref<1x32xf32, #tpu.memory_space<vmem>>, %arg4: memref<16x32xf32, #tpu.memory_space<vmem>>) attributes {dimension_semantics = [#tpu.dimension_semantics<parallel>], iteration_bounds = array<i64: 1>, scalar_prefetch = 0 : i64, scratch_operands = 0 : i64, tpu.core_type = #tpu.core_type<tc>, window_params = [{transform_indices = @transform_0, window_bounds = array<i64: 16, 32>}, {pipeline_mode = #tpu.pipeline_mode<synchronous>, transform_indices = @transform_1, window_bounds = array<i64: 32, 32>}, {pipeline_mode = #tpu.pipeline_mode<synchronous>, transform_indices = @transform_2, window_bounds = array<i64: 1, 32>}, {transform_indices = @transform_3, window_bounds = array<i64: 16, 32>}]} {
    %c0 = arith.constant 0 : index
    %c0_0 = arith.constant 0 : index
    %0 = vector.load %arg1[%c0, %c0_0] : memref<16x32xf32, #tpu.memory_space<vmem>>, vector<16x32xf32>
    %1 = arith.truncf %0 : vector<16x32xf32> to vector<16x32xbf16>
    %c0_1 = arith.constant 0 : index
    %c0_2 = arith.constant 0 : index
    %2 = vector.load %arg2[%c0_1, %c0_2] : memref<32x32xbf16, #tpu.memory_space<vmem>>, vector<32x32xbf16>
    %cst = arith.constant dense<0.000000e+00> : vector<16x32xf32>
    %3 = tpu.matmul %1, %2, %cst {dimension_numbers = #tpu.dot_dimension_numbers<[1], [0], [0], [1], [0, 0, 1, 1], [], []>} : vector<16x32xbf16>, vector<32x32xbf16>, vector<16x32xf32> -> vector<16x32xf32>
    %c0_3 = arith.constant 0 : index
    %c0_4 = arith.constant 0 : index
    %4 = vector.load %arg3[%c0_3, %c0_4] : memref<1x32xf32, #tpu.memory_space<vmem>>, vector<1x32xf32>
    %5 = vector.broadcast %4 : vector<1x32xf32> to vector<16x32xf32>
    %6 = arith.addf %3, %5 : vector<16x32xf32>
    %c0_5 = arith.constant 0 : index
    %c0_6 = arith.constant 0 : index
    %7 = vector.load %arg4[%c0_5, %c0_6] : memref<16x32xf32, #tpu.memory_space<vmem>>, vector<16x32xf32>
    tpu.vector_store %arg4[%c0_5, %c0_6], %6 {strides = array<i32>} : memref<16x32xf32, #tpu.memory_space<vmem>>, vector<16x32xf32>,
    return
  }
  func.func @transform_0(%arg0: i32) -> (i32, i32) {
    %c0_i32 = arith.constant 0 : i32
    %c0_i32_0 = arith.constant 0 : i32
    return %arg0, %c0_i32 : i32, i32
  }
  func.func @transform_1(%arg0: i32) -> (i32, i32) {
    %c0_i32 = arith.constant 0 : i32
    %c0_i32_0 = arith.constant 0 : i32
    %c0_i32_1 = arith.constant 0 : i32
    return %c0_i32, %c0_i32_0 : i32, i32
  }
  func.func @transform_2(%arg0: i32) -> (i32, i32) {
    %c0_i32 = arith.constant 0 : i32
    %c0_i32_0 = arith.constant 0 : i32
    %c0_i32_1 = arith.constant 0 : i32
    return %c0_i32, %c0_i32_0 : i32, i32
  }
  func.func @transform_3(%arg0: i32) -> (i32, i32) {
    %c0_i32 = arith.constant 0 : i32
    %c0_i32_0 = arith.constant 0 : i32
    return %arg0, %c0_i32 : i32, i32
  }
}

module attributes {stable_mosaic.version = 11 : i64} {
  func.func @qkv_kernel(%arg0: i32, %arg1: memref<16x32xf32, #tpu.memory_space<vmem>>, %arg2: memref<16x32xf32, #tpu.memory_space<vmem>>, %arg3: memref<16x32xf32, #tpu.memory_space<vmem>>, %arg4: memref<3x32x32xbf16, #tpu.memory_space<vmem>>, %arg5: memref<3x1x32xf32, #tpu.memory_space<vmem>>, %arg6: memref<16x32xf32, #tpu.memory_space<vmem>>, %arg7: memref<16x32xf32, #tpu.memory_space<vmem>>, %arg8: memref<16x32xf32, #tpu.memory_space<vmem>>) attributes {dimension_semantics = [#tpu.dimension_semantics<parallel>], iteration_bounds = array<i64: 1>, scalar_prefetch = 0 : i64, scratch_operands = 0 : i64, tpu.core_type = #tpu.core_type<tc>, window_params = [{transform_indices = @transform_0, window_bounds = array<i64: 16, 32>}, {transform_indices = @transform_1, window_bounds = array<i64: 16, 32>}, {transform_indices = @transform_2, window_bounds = array<i64: 16, 32>}, {pipeline_mode = #tpu.pipeline_mode<synchronous>, transform_indices = @transform_3, window_bounds = array<i64: 3, 32, 32>}, {pipeline_mode = #tpu.pipeline_mode<synchronous>, transform_indices = @transform_4, window_bounds = array<i64: 3, 1, 32>}, {transform_indices = @transform_5, window_bounds = array<i64: 16, 32>}, {transform_indices = @transform_6, window_bounds = array<i64: 16, 32>}, {transform_indices = @transform_7, window_bounds = array<i64: 16, 32>}]} {
    %c0 = arith.constant 0 : index
    %c0_0 = arith.constant 0 : index
    %0 = vector.load %arg1[%c0, %c0_0] : memref<16x32xf32, #tpu.memory_space<vmem>>, vector<16x32xf32>
    %1 = arith.truncf %0 : vector<16x32xf32> to vector<16x32xbf16>
    %c0_1 = arith.constant 0 : index
    %c0_2 = arith.constant 0 : index
    %c0_3 = arith.constant 0 : index
    %2 = vector.load %arg4[%c0_1, %c0_2, %c0_3] : memref<3x32x32xbf16, #tpu.memory_space<vmem>>, vector<1x32x32xbf16>
    %3 = vector.shape_cast %2 : vector<1x32x32xbf16> to vector<32x32xbf16>
    %cst = arith.constant dense<0.000000e+00> : vector<16x32xf32>
    %4 = tpu.matmul %1, %3, %cst {dimension_numbers = #tpu.dot_dimension_numbers<[1], [0], [0], [1], [0, 0, 1, 1], [], []>} : vector<16x32xbf16>, vector<32x32xbf16>, vector<16x32xf32> -> vector<16x32xf32>
    %c0_4 = arith.constant 0 : index
    %c0_5 = arith.constant 0 : index
    %c0_6 = arith.constant 0 : index
    %5 = vector.load %arg5[%c0_4, %c0_5, %c0_6] : memref<3x1x32xf32, #tpu.memory_space<vmem>>, vector<1x1x32xf32>
    %6 = vector.shape_cast %5 : vector<1x1x32xf32> to vector<1x32xf32>
    %7 = vector.broadcast %6 : vector<1x32xf32> to vector<16x32xf32>
    %8 = arith.addf %4, %7 : vector<16x32xf32>
    %c0_7 = arith.constant 0 : index
    %c0_8 = arith.constant 0 : index
    %9 = vector.load %arg6[%c0_7, %c0_8] : memref<16x32xf32, #tpu.memory_space<vmem>>, vector<16x32xf32>
    tpu.vector_store %arg6[%c0_7, %c0_8], %8 {strides = array<i32>} : memref<16x32xf32, #tpu.memory_space<vmem>>, vector<16x32xf32>,
    %c0_9 = arith.constant 0 : index
    %c0_10 = arith.constant 0 : index
    %10 = vector.load %arg2[%c0_9, %c0_10] : memref<16x32xf32, #tpu.memory_space<vmem>>, vector<16x32xf32>
    %11 = arith.truncf %10 : vector<16x32xf32> to vector<16x32xbf16>
    %c1 = arith.constant 1 : index
    %c0_11 = arith.constant 0 : index
    %c0_12 = arith.constant 0 : index
    %12 = vector.load %arg4[%c1, %c0_11, %c0_12] : memref<3x32x32xbf16, #tpu.memory_space<vmem>>, vector<1x32x32xbf16>
    %13 = vector.shape_cast %12 : vector<1x32x32xbf16> to vector<32x32xbf16>
    %cst_13 = arith.constant dense<0.000000e+00> : vector<16x32xf32>
    %14 = tpu.matmul %11, %13, %cst_13 {dimension_numbers = #tpu.dot_dimension_numbers<[1], [0], [0], [1], [0, 0, 1, 1], [], []>} : vector<16x32xbf16>, vector<32x32xbf16>, vector<16x32xf32> -> vector<16x32xf32>
    %c1_14 = arith.constant 1 : index
    %c0_15 = arith.constant 0 : index
    %c0_16 = arith.constant 0 : index
    %15 = vector.load %arg5[%c1_14, %c0_15, %c0_16] : memref<3x1x32xf32, #tpu.memory_space<vmem>>, vector<1x1x32xf32>
    %16 = vector.shape_cast %15 : vector<1x1x32xf32> to vector<1x32xf32>
    %17 = vector.broadcast %16 : vector<1x32xf32> to vector<16x32xf32>
    %18 = arith.addf %14, %17 : vector<16x32xf32>
    %c0_17 = arith.constant 0 : index
    %c0_18 = arith.constant 0 : index
    %19 = vector.load %arg7[%c0_17, %c0_18] : memref<16x32xf32, #tpu.memory_space<vmem>>, vector<16x32xf32>
    tpu.vector_store %arg7[%c0_17, %c0_18], %18 {strides = array<i32>} : memref<16x32xf32, #tpu.memory_space<vmem>>, vector<16x32xf32>,
    %c0_19 = arith.constant 0 : index
    %c0_20 = arith.constant 0 : index
    %20 = vector.load %arg3[%c0_19, %c0_20] : memref<16x32xf32, #tpu.memory_space<vmem>>, vector<16x32xf32>
    %21 = arith.truncf %20 : vector<16x32xf32> to vector<16x32xbf16>
    %c2 = arith.constant 2 : index
    %c0_21 = arith.constant 0 : index
    %c0_22 = arith.constant 0 : index
    %22 = vector.load %arg4[%c2, %c0_21, %c0_22] : memref<3x32x32xbf16, #tpu.memory_space<vmem>>, vector<1x32x32xbf16>
    %23 = vector.shape_cast %22 : vector<1x32x32xbf16> to vector<32x32xbf16>
    %cst_23 = arith.constant dense<0.000000e+00> : vector<16x32xf32>
    %24 = tpu.matmul %21, %23, %cst_23 {dimension_numbers = #tpu.dot_dimension_numbers<[1], [0], [0], [1], [0, 0, 1, 1], [], []>} : vector<16x32xbf16>, vector<32x32xbf16>, vector<16x32xf32> -> vector<16x32xf32>
    %c2_24 = arith.constant 2 : index
    %c0_25 = arith.constant 0 : index
    %c0_26 = arith.constant 0 : index
    %25 = vector.load %arg5[%c2_24, %c0_25, %c0_26] : memref<3x1x32xf32, #tpu.memory_space<vmem>>, vector<1x1x32xf32>
    %26 = vector.shape_cast %25 : vector<1x1x32xf32> to vector<1x32xf32>
    %27 = vector.broadcast %26 : vector<1x32xf32> to vector<16x32xf32>
    %28 = arith.addf %24, %27 : vector<16x32xf32>
    %c0_27 = arith.constant 0 : index
    %c0_28 = arith.constant 0 : index
    %29 = vector.load %arg8[%c0_27, %c0_28] : memref<16x32xf32, #tpu.memory_space<vmem>>, vector<16x32xf32>
    tpu.vector_store %arg8[%c0_27, %c0_28], %28 {strides = array<i32>} : memref<16x32xf32, #tpu.memory_space<vmem>>, vector<16x32xf32>,
    return
  }
  func.func @transform_0(%arg0: i32) -> (i32, i32) {
    %c0_i32 = arith.constant 0 : i32
    %c0_i32_0 = arith.constant 0 : i32
    return %arg0, %c0_i32 : i32, i32
  }
  func.func @transform_1(%arg0: i32) -> (i32, i32) {
    %c0_i32 = arith.constant 0 : i32
    %c0_i32_0 = arith.constant 0 : i32
    return %arg0, %c0_i32 : i32, i32
  }
  func.func @transform_2(%arg0: i32) -> (i32, i32) {
    %c0_i32 = arith.constant 0 : i32
    %c0_i32_0 = arith.constant 0 : i32
    return %arg0, %c0_i32 : i32, i32
  }
  func.func @transform_3(%arg0: i32) -> (i32, i32, i32) {
    %c0_i32 = arith.constant 0 : i32
    %c0_i32_0 = arith.constant 0 : i32
    %c0_i32_1 = arith.constant 0 : i32
    %c0_i32_2 = arith.constant 0 : i32
    return %c0_i32, %c0_i32_0, %c0_i32_1 : i32, i32, i32
  }
  func.func @transform_4(%arg0: i32) -> (i32, i32, i32) {
    %c0_i32 = arith.constant 0 : i32
    %c0_i32_0 = arith.constant 0 : i32
    %c0_i32_1 = arith.constant 0 : i32
    %c0_i32_2 = arith.constant 0 : i32
    return %c0_i32, %c0_i32_0, %c0_i32_1 : i32, i32, i32
  }
  func.func @transform_5(%arg0: i32) -> (i32, i32) {
    %c0_i32 = arith.constant 0 : i32
    %c0_i32_0 = arith.constant 0 : i32
    return %arg0, %c0_i32 : i32, i32
  }
  func.func @transform_6(%arg0: i32) -> (i32, i32) {
    %c0_i32 = arith.constant 0 : i32
    %c0_i32_0 = arith.constant 0 : i32
    return %arg0, %c0_i32 : i32, i32
  }
  func.func @transform_7(%arg0: i32) -> (i32, i32) {
    %c0_i32 = arith.constant 0 : i32
    %c0_i32_0 = arith.constant 0 : i32
    return %arg0, %c0_i32 : i32, i32
  }
}

module attributes {stable_mosaic.version = 11 : i64} {
  func.func @attn_kernel(%arg0: i32, %arg1: memref<1x8x32xf32, #tpu.memory_space<vmem>>, %arg2: memref<1x8x32xf32, #tpu.memory_space<vmem>>, %arg3: memref<1x8x32xf32, #tpu.memory_space<vmem>>, %arg4: memref<1x1x8xf32, #tpu.memory_space<vmem>>, %arg5: memref<1x8x32xf32, #tpu.memory_space<vmem>>) attributes {dimension_semantics = [#tpu.dimension_semantics<parallel>], iteration_bounds = array<i64: 2>, scalar_prefetch = 0 : i64, scratch_operands = 0 : i64, tpu.core_type = #tpu.core_type<tc>, window_params = [{transform_indices = @transform_0, window_bounds = array<i64: 1, 8, 32>}, {transform_indices = @transform_1, window_bounds = array<i64: 1, 8, 32>}, {transform_indices = @transform_2, window_bounds = array<i64: 1, 8, 32>}, {transform_indices = @transform_3, window_bounds = array<i64: 1, 1, 8>}, {transform_indices = @transform_4, window_bounds = array<i64: 1, 8, 32>}]} {
    %c0 = arith.constant 0 : index
    %c0_0 = arith.constant 0 : index
    %c0_1 = arith.constant 0 : index
    %0 = vector.load %arg4[%c0, %c0_0, %c0_1] : memref<1x1x8xf32, #tpu.memory_space<vmem>>, vector<1x1x8xf32>
    %1 = vector.shape_cast %0 : vector<1x1x8xf32> to vector<1x8xf32>
    %c0_2 = arith.constant 0 : index
    %c0_3 = arith.constant 0 : index
    %c0_4 = arith.constant 0 : index
    %2 = vector.load %arg1[%c0_2, %c0_3, %c0_4] : memref<1x8x32xf32, #tpu.memory_space<vmem>>, vector<1x8x32xf32>
    %3 = vector.shape_cast %2 : vector<1x8x32xf32> to vector<8x32xf32>
    %4 = arith.truncf %3 : vector<8x32xf32> to vector<8x32xbf16>
    %c0_5 = arith.constant 0 : index
    %c0_6 = arith.constant 0 : index
    %c0_7 = arith.constant 0 : index
    %5 = vector.load %arg2[%c0_5, %c0_6, %c0_7] : memref<1x8x32xf32, #tpu.memory_space<vmem>>, vector<1x8x32xf32>
    %6 = vector.shape_cast %5 : vector<1x8x32xf32> to vector<8x32xf32>
    %7 = arith.truncf %6 : vector<8x32xf32> to vector<8x32xbf16>
    %c0_8 = arith.constant 0 : index
    %c0_9 = arith.constant 0 : index
    %c0_10 = arith.constant 0 : index
    %8 = vector.load %arg3[%c0_8, %c0_9, %c0_10] : memref<1x8x32xf32, #tpu.memory_space<vmem>>, vector<1x8x32xf32>
    %9 = vector.shape_cast %8 : vector<1x8x32xf32> to vector<8x32xf32>
    %10 = arith.truncf %9 : vector<8x32xf32> to vector<8x32xbf16>
    %11 = vector.extract_strided_slice %4 {offsets = [0, 0], sizes = [8, 8], strides = [1, 1]} : vector<8x32xbf16> to vector<8x8xbf16>
    %12 = vector.extract_strided_slice %7 {offsets = [0, 0], sizes = [8, 8], strides = [1, 1]} : vector<8x32xbf16> to vector<8x8xbf16>
    %13 = vector.extract_strided_slice %10 {offsets = [0, 0], sizes = [8, 8], strides = [1, 1]} : vector<8x32xbf16> to vector<8x8xbf16>
    %cst = arith.constant dense<0.000000e+00> : vector<8x8xf32>
    %14 = tpu.matmul %11, %12, %cst {dimension_numbers = #tpu.dot_dimension_numbers<[1], [1], [0], [0], [0, 0, 1, 0], [], []>} : vector<8x8xbf16>, vector<8x8xbf16>, vector<8x8xf32> -> vector<8x8xf32>
    %cst_11 = arith.constant 0.353553385 : f32
    %15 = vector.broadcast %cst_11 : f32 to vector<8x8xf32>
    %16 = arith.mulf %14, %15 : vector<8x8xf32>
    %17 = vector.broadcast %1 : vector<1x8xf32> to vector<8x8xf32>
    %18 = arith.addf %16, %17 : vector<8x8xf32>
    %cst_12 = arith.constant dense<0xFF800000> : vector<8xf32>
    %19 = vector.multi_reduction <maximumf>, %18, %cst_12 [1] : vector<8x8xf32> to vector<8xf32>
    %20 = vector.shape_cast %19 : vector<8xf32> to vector<8x1xf32>
    %21 = vector.broadcast %20 : vector<8x1xf32> to vector<8x8xf32>
    %22 = arith.subf %18, %21 : vector<8x8xf32>
    %23 = math.exp %22 : vector<8x8xf32>
    %cst_13 = arith.constant dense<0.000000e+00> : vector<8xf32>
    %24 = vector.multi_reduction <add>, %23, %cst_13 [1] : vector<8x8xf32> to vector<8xf32>
    %25 = vector.shape_cast %24 : vector<8xf32> to vector<8x1xf32>
    %26 = tpu.reciprocal %25 {approx = true} : vector<8x1xf32> -> vector<8x1xf32>
    %27 = vector.broadcast %26 : vector<8x1xf32> to vector<8x8xf32>
    %28 = arith.mulf %23, %27 : vector<8x8xf32>
    %29 = arith.truncf %28 : vector<8x8xf32> to vector<8x8xbf16>
    %cst_14 = arith.constant dense<0.000000e+00> : vector<8x8xf32>
    %30 = tpu.matmul %29, %13, %cst_14 {dimension_numbers = #tpu.dot_dimension_numbers<[1], [0], [0], [1], [0, 0, 1, 1], [], []>} : vector<8x8xbf16>, vector<8x8xbf16>, vector<8x8xf32> -> vector<8x8xf32>
    %31 = vector.extract_strided_slice %4 {offsets = [0, 8], sizes = [8, 8], strides = [1, 1]} : vector<8x32xbf16> to vector<8x8xbf16>
    %32 = vector.extract_strided_slice %7 {offsets = [0, 8], sizes = [8, 8], strides = [1, 1]} : vector<8x32xbf16> to vector<8x8xbf16>
    %33 = vector.extract_strided_slice %10 {offsets = [0, 8], sizes = [8, 8], strides = [1, 1]} : vector<8x32xbf16> to vector<8x8xbf16>
    %cst_15 = arith.constant dense<0.000000e+00> : vector<8x8xf32>
    %34 = tpu.matmul %31, %32, %cst_15 {dimension_numbers = #tpu.dot_dimension_numbers<[1], [1], [0], [0], [0, 0, 1, 0], [], []>} : vector<8x8xbf16>, vector<8x8xbf16>, vector<8x8xf32> -> vector<8x8xf32>
    %cst_16 = arith.constant 0.353553385 : f32
    %35 = vector.broadcast %cst_16 : f32 to vector<8x8xf32>
    %36 = arith.mulf %34, %35 : vector<8x8xf32>
    %37 = vector.broadcast %1 : vector<1x8xf32> to vector<8x8xf32>
    %38 = arith.addf %36, %37 : vector<8x8xf32>
    %cst_17 = arith.constant dense<0xFF800000> : vector<8xf32>
    %39 = vector.multi_reduction <maximumf>, %38, %cst_17 [1] : vector<8x8xf32> to vector<8xf32>
    %40 = vector.shape_cast %39 : vector<8xf32> to vector<8x1xf32>
    %41 = vector.broadcast %40 : vector<8x1xf32> to vector<8x8xf32>
    %42 = arith.subf %38, %41 : vector<8x8xf32>
    %43 = math.exp %42 : vector<8x8xf32>
    %cst_18 = arith.constant dense<0.000000e+00> : vector<8xf32>
    %44 = vector.multi_reduction <add>, %43, %cst_18 [1] : vector<8x8xf32> to vector<8xf32>
    %45 = vector.shape_cast %44 : vector<8xf32> to vector<8x1xf32>
    %46 = tpu.reciprocal %45 {approx = true} : vector<8x1xf32> -> vector<8x1xf32>
    %47 = vector.broadcast %46 : vector<8x1xf32> to vector<8x8xf32>
    %48 = arith.mulf %43, %47 : vector<8x8xf32>
    %49 = arith.truncf %48 : vector<8x8xf32> to vector<8x8xbf16>
    %cst_19 = arith.constant dense<0.000000e+00> : vector<8x8xf32>
    %50 = tpu.matmul %49, %33, %cst_19 {dimension_numbers = #tpu.dot_dimension_numbers<[1], [0], [0], [1], [0, 0, 1, 1], [], []>} : vector<8x8xbf16>, vector<8x8xbf16>, vector<8x8xf32> -> vector<8x8xf32>
    %51 = vector.extract_strided_slice %4 {offsets = [0, 16], sizes = [8, 8], strides = [1, 1]} : vector<8x32xbf16> to vector<8x8xbf16>
    %52 = vector.extract_strided_slice %7 {offsets = [0, 16], sizes = [8, 8], strides = [1, 1]} : vector<8x32xbf16> to vector<8x8xbf16>
    %53 = vector.extract_strided_slice %10 {offsets = [0, 16], sizes = [8, 8], strides = [1, 1]} : vector<8x32xbf16> to vector<8x8xbf16>
    %cst_20 = arith.constant dense<0.000000e+00> : vector<8x8xf32>
    %54 = tpu.matmul %51, %52, %cst_20 {dimension_numbers = #tpu.dot_dimension_numbers<[1], [1], [0], [0], [0, 0, 1, 0], [], []>} : vector<8x8xbf16>, vector<8x8xbf16>, vector<8x8xf32> -> vector<8x8xf32>
    %cst_21 = arith.constant 0.353553385 : f32
    %55 = vector.broadcast %cst_21 : f32 to vector<8x8xf32>
    %56 = arith.mulf %54, %55 : vector<8x8xf32>
    %57 = vector.broadcast %1 : vector<1x8xf32> to vector<8x8xf32>
    %58 = arith.addf %56, %57 : vector<8x8xf32>
    %cst_22 = arith.constant dense<0xFF800000> : vector<8xf32>
    %59 = vector.multi_reduction <maximumf>, %58, %cst_22 [1] : vector<8x8xf32> to vector<8xf32>
    %60 = vector.shape_cast %59 : vector<8xf32> to vector<8x1xf32>
    %61 = vector.broadcast %60 : vector<8x1xf32> to vector<8x8xf32>
    %62 = arith.subf %58, %61 : vector<8x8xf32>
    %63 = math.exp %62 : vector<8x8xf32>
    %cst_23 = arith.constant dense<0.000000e+00> : vector<8xf32>
    %64 = vector.multi_reduction <add>, %63, %cst_23 [1] : vector<8x8xf32> to vector<8xf32>
    %65 = vector.shape_cast %64 : vector<8xf32> to vector<8x1xf32>
    %66 = tpu.reciprocal %65 {approx = true} : vector<8x1xf32> -> vector<8x1xf32>
    %67 = vector.broadcast %66 : vector<8x1xf32> to vector<8x8xf32>
    %68 = arith.mulf %63, %67 : vector<8x8xf32>
    %69 = arith.truncf %68 : vector<8x8xf32> to vector<8x8xbf16>
    %cst_24 = arith.constant dense<0.000000e+00> : vector<8x8xf32>
    %70 = tpu.matmul %69, %53, %cst_24 {dimension_numbers = #tpu.dot_dimension_numbers<[1], [0], [0], [1], [0, 0, 1, 1], [], []>} : vector<8x8xbf16>, vector<8x8xbf16>, vector<8x8xf32> -> vector<8x8xf32>
    %71 = vector.extract_strided_slice %4 {offsets = [0, 24], sizes = [8, 8], strides = [1, 1]} : vector<8x32xbf16> to vector<8x8xbf16>
    %72 = vector.extract_strided_slice %7 {offsets = [0, 24], sizes = [8, 8], strides = [1, 1]} : vector<8x32xbf16> to vector<8x8xbf16>
    %73 = vector.extract_strided_slice %10 {offsets = [0, 24], sizes = [8, 8], strides = [1, 1]} : vector<8x32xbf16> to vector<8x8xbf16>
    %cst_25 = arith.constant dense<0.000000e+00> : vector<8x8xf32>
    %74 = tpu.matmul %71, %72, %cst_25 {dimension_numbers = #tpu.dot_dimension_numbers<[1], [1], [0], [0], [0, 0, 1, 0], [], []>} : vector<8x8xbf16>, vector<8x8xbf16>, vector<8x8xf32> -> vector<8x8xf32>
    %cst_26 = arith.constant 0.353553385 : f32
    %75 = vector.broadcast %cst_26 : f32 to vector<8x8xf32>
    %76 = arith.mulf %74, %75 : vector<8x8xf32>
    %77 = vector.broadcast %1 : vector<1x8xf32> to vector<8x8xf32>
    %78 = arith.addf %76, %77 : vector<8x8xf32>
    %cst_27 = arith.constant dense<0xFF800000> : vector<8xf32>
    %79 = vector.multi_reduction <maximumf>, %78, %cst_27 [1] : vector<8x8xf32> to vector<8xf32>
    %80 = vector.shape_cast %79 : vector<8xf32> to vector<8x1xf32>
    %81 = vector.broadcast %80 : vector<8x1xf32> to vector<8x8xf32>
    %82 = arith.subf %78, %81 : vector<8x8xf32>
    %83 = math.exp %82 : vector<8x8xf32>
    %cst_28 = arith.constant dense<0.000000e+00> : vector<8xf32>
    %84 = vector.multi_reduction <add>, %83, %cst_28 [1] : vector<8x8xf32> to vector<8xf32>
    %85 = vector.shape_cast %84 : vector<8xf32> to vector<8x1xf32>
    %86 = tpu.reciprocal %85 {approx = true} : vector<8x1xf32> -> vector<8x1xf32>
    %87 = vector.broadcast %86 : vector<8x1xf32> to vector<8x8xf32>
    %88 = arith.mulf %83, %87 : vector<8x8xf32>
    %89 = arith.truncf %88 : vector<8x8xf32> to vector<8x8xbf16>
    %cst_29 = arith.constant dense<0.000000e+00> : vector<8x8xf32>
    %90 = tpu.matmul %89, %73, %cst_29 {dimension_numbers = #tpu.dot_dimension_numbers<[1], [0], [0], [1], [0, 0, 1, 1], [], []>} : vector<8x8xbf16>, vector<8x8xbf16>, vector<8x8xf32> -> vector<8x8xf32>
    %91 = tpu.concatenate %30, %50, %70, %90 in 1 : vector<8x8xf32>, vector<8x8xf32>, vector<8x8xf32>, vector<8x8xf32> -> vector<8x32xf32>
    %c0_30 = arith.constant 0 : index
    %c0_31 = arith.constant 0 : index
    %c0_32 = arith.constant 0 : index
    %92 = vector.load %arg5[%c0_30, %c0_31, %c0_32] : memref<1x8x32xf32, #tpu.memory_space<vmem>>, vector<1x8x32xf32>
    %93 = vector.shape_cast %92 : vector<1x8x32xf32> to vector<8x32xf32>
    %94 = vector.shape_cast %91 : vector<8x32xf32> to vector<1x8x32xf32>
    tpu.vector_store %arg5[%c0_30, %c0_31, %c0_32], %94 {strides = array<i32>} : memref<1x8x32xf32, #tpu.memory_space<vmem>>, vector<1x8x32xf32>,
    return
  }
  func.func @transform_0(%arg0: i32) -> (i32, i32, i32) {
    %c0_i32 = arith.constant 0 : i32
    %c0_i32_0 = arith.constant 0 : i32
    %c0_i32_1 = arith.constant 0 : i32
    return %arg0, %c0_i32, %c0_i32_0 : i32, i32, i32
  }
  func.func @transform_1(%arg0: i32) -> (i32, i32, i32) {
    %c0_i32 = arith.constant 0 : i32
    %c0_i32_0 = arith.constant 0 : i32
    %c0_i32_1 = arith.constant 0 : i32
    return %arg0, %c0_i32, %c0_i32_0 : i32, i32, i32
  }
  func.func @transform_2(%arg0: i32) -> (i32, i32, i32) {
    %c0_i32 = arith.constant 0 : i32
    %c0_i32_0 = arith.constant 0 : i32
    %c0_i32_1 = arith.constant 0 : i32
    return %arg0, %c0_i32, %c0_i32_0 : i32, i32, i32
  }
  func.func @transform_3(%arg0: i32) -> (i32, i32, i32) {
    %c0_i32 = arith.constant 0 : i32
    %c0_i32_0 = arith.constant 0 : i32
    %c0_i32_1 = arith.constant 0 : i32
    return %arg0, %c0_i32, %c0_i32_0 : i32, i32, i32
  }
  func.func @transform_4(%arg0: i32) -> (i32, i32, i32) {
    %c0_i32 = arith.constant 0 : i32
    %c0_i32_0 = arith.constant 0 : i32
    %c0_i32_1 = arith.constant 0 : i32
    return %arg0, %c0_i32, %c0_i32_0 : i32, i32, i32
  }
}

</mosaic_0001>

<llo_original>
// kernel: mhatt_forward.5
$region0: #{mhatt_forward.5}
  #allocation0 [shape = 'u32[]', space=smem, size = 0x4, offset = 0x4, fixed_abs, tag = 'smem constant byte address 0x4 - core index']
  #allocation1 [shape = 'u32[144,128]{1,0:T(1,128)}', space=vmem, size = 0x12000, scoped, tag = 'internal scratch']
  %s0 = inlined_call_operand.vmem [shape: f32[16,32], index: 0, kind: input, shape index: {}]
  %s1 = inlined_call_operand.vmem [shape: bf16[32,32], index: 1, kind: input, shape index: {}]
  %s2 = inlined_call_operand.vmem [shape: f32[1,32], index: 2, kind: input, shape index: {}]
  %s3 = inlined_call_operand.hbm [shape: f32[16,32], index: 3, kind: output, shape index: {}]
  %s4 = sld [smem:[#allocation0]]
  $region22: #{mhatt_forward.5} parent=0
    _
  %s6 = ssub.s32 1, %s4
  %s7 = scalar_select 0, %s6, %s4
  $region1: #{mhatt_forward.5} parent=0
    #allocation2 [shape = 'u8[8192]{0}', space=vmem, size = 0x2000, scoped, tag = 'output window, operand 0, single buffered']
    #allocation3 [shape = 's32[1]{0}', space=sflag, size = 0x4, scoped, tag = 'scoped memory for mhatt_forward.5']
    %8 = vsyncpa [#allocation3], 0
    // Predicated region
    $region2: #{mhatt_forward.5} parent=1 // pred_check
      _
    $region3: #{mhatt_forward.5} parent=1 // pred_check_branch
      %10 = sbr.rel (0) target = $region5
    $region4: #{mhatt_forward.5} parent=1 // pred_region
      _
    $region5: #{mhatt_forward.5} parent=1 // pred_fallthru
      _
    // Predicated region
    $region6: #{mhatt_forward.5} parent=1 // pred_check
      _
    $region7: #{mhatt_forward.5} parent=1 // pred_check_branch
      %12 = sbr.rel (0) target = $region9
    $region8: #{mhatt_forward.5} parent=1 // pred_region
      _
    $region9: #{mhatt_forward.5} parent=1 // pred_fallthru
      _
    // Predicated region
    $region10: #{mhatt_forward.5} parent=1 // pred_check
      _
    $region11: #{mhatt_forward.5} parent=1 // pred_check_branch
      %14 = sbr.rel (0) target = $region13
    $region12: #{mhatt_forward.5} parent=1 // pred_region
      _
    $region13: #{mhatt_forward.5} parent=1 // pred_fallthru
      _
    %v16 = vld [vmem:[%s0] sm:$0xff]
    %v17 = vld [vmem:[%s0 + $0x8] sm:$0xff]
    %v18 = vpack.c.bf16 %v17, %v16
    %v19 = vld [vmem:[%s1] sm:$0xf]
    %v20 = vld [vmem:[%s1 + $0x4] sm:$0xf]
    %v21 = vld [vmem:[%s1 + $0x8] sm:$0xf]
    %v22 = vld [vmem:[%s1 + $0xc] sm:$0xf]
    %v23 = vld [vmem:[%s2] sm:$0x1]
    %v25 = vlaneseq
    %v26 = vshrl.u32 %v25, 7
    %v27 = vsub.s32 0, %v26
    %v28 = vrot.slane %v23, %v27
    %v34 = vunpack.c.l.b16 %v19
    %v35 = vunpack.c.l.b16 %v20
    %v36 = vunpack.c.l.b16 %v21
    %v37 = vunpack.c.l.b16 %v22
    %v38 = vpack.c.b16 %v35, %v34
    %v39 = vpack.c.b16 %v37, %v36
    %vm42 = vcmask 261120
    %v44 = vsel %vm42, %v18, 0
    %46 = vmatprep.subr.bf16.mxu0 0
    %47 = vmatpush1.bf16.msra.mxu0 %v38
    %48 = vmatprep.subr.bf16.mxu0 0
    %49 = vmatpush1.bf16.msra.mxu0 %v39
    %50 = vmatprep.subr.bf16.mxu0 0
    %51 = vmatpush1.bf16.msra.mxu0 0
    %52 = vmatprep.subr.bf16.mxu0 0
    %53 = vmatpush1.bf16.msra.mxu0 0
    %54 = vmatprep.subr.bf16.mxu0 0
    %55 = vmatpush1.bf16.msra.mxu0 0
    %56 = vmatprep.subr.bf16.mxu0 0
    %57 = vmatpush1.bf16.msra.mxu0 0
    %58 = vmatprep.subr.bf16.mxu0 0
    %59 = vmatpush1.bf16.msra.mxu0 0
    %60 = vmatprep.subr.bf16.mxu0 0
    %61 = vmatpush1.bf16.msra.mxu0 0
    %62 = vmatprep.subr.bf16.mxu0 0
    %63 = vmatpush1.bf16.msra.mxu0 0
    %64 = vmatprep.subr.bf16.mxu0 0
    %65 = vmatpush1.bf16.msra.mxu0 0
    %66 = vmatprep.subr.bf16.mxu0 0
    %67 = vmatpush1.bf16.msra.mxu0 0
    %68 = vmatprep.subr.bf16.mxu0 0
    %69 = vmatpush1.bf16.msra.mxu0 0
    %70 = vmatprep.subr.bf16.mxu0 0
    %71 = vmatpush1.bf16.msra.mxu0 0
    %72 = vmatprep.subr.bf16.mxu0 0
    %73 = vmatpush1.bf16.msra.mxu0 0
    %74 = vmatprep.subr.bf16.mxu0 0
    %75 = vmatpush1.bf16.msra.mxu0 0
    %76 = vmatprep.subr.bf16.mxu0 0
    %77 = vmatpush1.bf16.msra.mxu0 0
    %78 = vmatprep.mubr.bf16.mxu0 0
    %79 = vmatmul.mubr.bf16.gmra.mrb[0].mxu0 %v44
    %v80 = vpop.f32.mrb[0].mxu0
    %v81 = vadd.f32 %v28, %v80
    %v82 = vpop.f32.mrb[0].mxu0
    %v83 = vpop.f32.mrb[0].mxu0
    %v84 = vadd.f32 %v28, %v83
    %v85 = vpop.f32.mrb[0].mxu0
    %86 = vdwg.mxu0
    %87 = vst.msk [vmem:[#allocation2] sm:$0xff] %vm42, %v81
    %88 = vst.msk [vmem:[#allocation2 + $0x8] sm:$0xff] %vm42, %v84
    // Predicated region
    $region14: #{mhatt_forward.5} parent=1 // pred_check
      _
    $region15: #{mhatt_forward.5} parent=1 // pred_check_branch
      %90 = sbr.rel (0) target = $region17
    $region16: #{mhatt_forward.5} parent=1 // pred_region
      %s92 = ssub.s32 256, 256
      %93 = vsyncadd [#allocation3], %s92
      %s94 = sshll.u32 [#allocation2], 4
      %s95 = int_to_ptr.vmem [resolvable:$true] %s94
      %100 = dma.vmem_to_hbm [thread:$0]  %s95, 256, %s3, [#allocation3], 128, 128, 8
    $region17: #{mhatt_forward.5} parent=1 // pred_fallthru
      _
    // Predicated region
    $region18: #{mhatt_forward.5} parent=1 // pred_check
      _
    $region19: #{mhatt_forward.5} parent=1 // pred_check_branch
      %102 = sbr.rel (0) target = $region21
    $region20: #{mhatt_forward.5} parent=1 // pred_region
      %103 = dma.done [#allocation3], 256
    $region21: #{mhatt_forward.5} parent=1 // pred_fallthru
      _
    %104 = vsyncpa [#allocation3], 1

// kernel: mhatt_forward.3
$region0: #{mhatt_forward.3}
  #allocation0 [shape = 'u32[]', space=smem, size = 0x4, offset = 0x4, fixed_abs, tag = 'smem constant byte address 0x4 - core index']
  #allocation1 [shape = 'u32[144,128]{1,0:T(1,128)}', space=vmem, size = 0x12000, scoped, tag = 'internal scratch']
  %s0 = inlined_call_operand.vmem [shape: f32[16,32], index: 0, kind: input, shape index: {}]
  %s1 = inlined_call_operand.vmem [shape: f32[16,32], index: 1, kind: input, shape index: {}]
  %s2 = inlined_call_operand.vmem [shape: f32[16,32], index: 2, kind: input, shape index: {}]
  %s3 = inlined_call_operand.vmem [shape: bf16[3,32,32], index: 3, kind: input, shape index: {}]
  %s4 = inlined_call_operand.vmem [shape: f32[3,1,32], index: 4, kind: input, shape index: {}]
  %s5 = inlined_call_operand.vmem [shape: f32[16,32], index: 5, kind: output, shape index: {0}]
  %s6 = inlined_call_operand.vmem [shape: f32[16,32], index: 6, kind: output, shape index: {1}]
  %s7 = inlined_call_operand.vmem [shape: f32[16,32], index: 7, kind: output, shape index: {2}]
  %8 = xla_tuple %s5, %s6, %s7
  %s9 = sld [smem:[#allocation0]]
  $region46: #{mhatt_forward.3} parent=0
    _
  %s11 = ssub.s32 1, %s9
  %s12 = scalar_select 0, %s11, %s9
  // Predicated region
  $region2: #{mhatt_forward.3} parent=0 // pred_check
    _
  $region3: #{mhatt_forward.3} parent=0 // pred_check_branch
    %14 = sbr.rel (0) target = $region5
  $region4: #{mhatt_forward.3} parent=0 // pred_region
    _
  $region5: #{mhatt_forward.3} parent=0 // pred_fallthru
    _
  // Predicated region
  $region6: #{mhatt_forward.3} parent=0 // pred_check
    _
  $region7: #{mhatt_forward.3} parent=0 // pred_check_branch
    %16 = sbr.rel (0) target = $region9
  $region8: #{mhatt_forward.3} parent=0 // pred_region
    _
  $region9: #{mhatt_forward.3} parent=0 // pred_fallthru
    _
  // Predicated region
  $region10: #{mhatt_forward.3} parent=0 // pred_check
    _
  $region11: #{mhatt_forward.3} parent=0 // pred_check_branch
    %18 = sbr.rel (0) target = $region13
  $region12: #{mhatt_forward.3} parent=0 // pred_region
    _
  $region13: #{mhatt_forward.3} parent=0 // pred_fallthru
    _
  // Predicated region
  $region14: #{mhatt_forward.3} parent=0 // pred_check
    _
  $region15: #{mhatt_forward.3} parent=0 // pred_check_branch
    %20 = sbr.rel (0) target = $region17
  $region16: #{mhatt_forward.3} parent=0 // pred_region
    _
  $region17: #{mhatt_forward.3} parent=0 // pred_fallthru
    _
  // Predicated region
  $region18: #{mhatt_forward.3} parent=0 // pred_check
    _
  $region19: #{mhatt_forward.3} parent=0 // pred_check_branch
    %22 = sbr.rel (0) target = $region21
  $region20: #{mhatt_forward.3} parent=0 // pred_region
    _
  $region21: #{mhatt_forward.3} parent=0 // pred_fallthru
    _
  %v24 = vld [vmem:[%s0] sm:$0xff]
  %v25 = vld [vmem:[%s0 + $0x8] sm:$0xff]
  %v26 = vpack.c.bf16 %v25, %v24
  %v27 = vld [vmem:[%s3] sm:$0xf]
  %v28 = vld [vmem:[%s3 + $0x4] sm:$0xf]
  %v29 = vld [vmem:[%s3 + $0x8] sm:$0xf]
  %v30 = vld [vmem:[%s3 + $0xc] sm:$0xf]
  %v31 = vld [vmem:[%s4] sm:$0x1]
  %v33 = vlaneseq
  %v34 = vshrl.u32 %v33, 7
  %v35 = vsub.s32 0, %v34
  %v36 = vrot.slane %v31, %v35
  %v42 = vunpack.c.l.b16 %v27
  %v43 = vunpack.c.l.b16 %v28
  %v44 = vunpack.c.l.b16 %v29
  %v45 = vunpack.c.l.b16 %v30
  %v46 = vpack.c.b16 %v43, %v42
  %v47 = vpack.c.b16 %v45, %v44
  %vm50 = vcmask 261120
  %v52 = vsel %vm50, %v26, 0
  %54 = vmatprep.subr.bf16.mxu0 0
  %55 = vmatpush1.bf16.msra.mxu0 %v46
  %56 = vmatprep.subr.bf16.mxu0 0
  %57 = vmatpush1.bf16.msra.mxu0 %v47
  %58 = vmatprep.subr.bf16.mxu0 0
  %59 = vmatpush1.bf16.msra.mxu0 0
  %60 = vmatprep.subr.bf16.mxu0 0
  %61 = vmatpush1.bf16.msra.mxu0 0
  %62 = vmatprep.subr.bf16.mxu0 0
  %63 = vmatpush1.bf16.msra.mxu0 0
  %64 = vmatprep.subr.bf16.mxu0 0
  %65 = vmatpush1.bf16.msra.mxu0 0
  %66 = vmatprep.subr.bf16.mxu0 0
  %67 = vmatpush1.bf16.msra.mxu0 0
  %68 = vmatprep.subr.bf16.mxu0 0
  %69 = vmatpush1.bf16.msra.mxu0 0
  %70 = vmatprep.subr.bf16.mxu0 0
  %71 = vmatpush1.bf16.msra.mxu0 0
  %72 = vmatprep.subr.bf16.mxu0 0
  %73 = vmatpush1.bf16.msra.mxu0 0
  %74 = vmatprep.subr.bf16.mxu0 0
  %75 = vmatpush1.bf16.msra.mxu0 0
  %76 = vmatprep.subr.bf16.mxu0 0
  %77 = vmatpush1.bf16.msra.mxu0 0
  %78 = vmatprep.subr.bf16.mxu0 0
  %79 = vmatpush1.bf16.msra.mxu0 0
  %80 = vmatprep.subr.bf16.mxu0 0
  %81 = vmatpush1.bf16.msra.mxu0 0
  %82 = vmatprep.subr.bf16.mxu0 0
  %83 = vmatpush1.bf16.msra.mxu0 0
  %84 = vmatprep.subr.bf16.mxu0 0
  %85 = vmatpush1.bf16.msra.mxu0 0
  %86 = vmatprep.mubr.bf16.mxu0 0
  %87 = vmatmul.mubr.bf16.gmra.mrb[0].mxu0 %v52
  %v88 = vpop.f32.mrb[0].mxu0
  %v89 = vadd.f32 %v36, %v88
  %v90 = vpop.f32.mrb[0].mxu0
  %v91 = vpop.f32.mrb[0].mxu0
  %v92 = vadd.f32 %v36, %v91
  %v93 = vpop.f32.mrb[0].mxu0
  %94 = vdwg.mxu0
  %95 = vst.msk [vmem:[%s5] sm:$0xff] %vm50, %v89
  %96 = vst.msk [vmem:[%s5 + $0x8] sm:$0xff] %vm50, %v92
  %v97 = vld [vmem:[%s1] sm:$0xff]
  %v98 = vld [vmem:[%s1 + $0x8] sm:$0xff]
  %v99 = vpack.c.bf16 %v98, %v97
  %s100 = scalar_lea.vmem %s3, 16
  %v101 = vld [vmem:[%s100] sm:$0xf]
  %v102 = vld [vmem:[%s100 + $0x4] sm:$0xf]
  %v103 = vld [vmem:[%s100 + $0x8] sm:$0xf]
  %v104 = vld [vmem:[%s100 + $0xc] sm:$0xf]
  %s105 = scalar_lea.vmem %s4, 1
  %v106 = vld [vmem:[%s105] sm:$0x1]
  %v108 = vlaneseq
  %v109 = vshrl.u32 %v108, 7
  %v110 = vsub.s32 0, %v109
  %v111 = vrot.slane %v106, %v110
  %v117 = vunpack.c.l.b16 %v101
  %v118 = vunpack.c.l.b16 %v102
  %v119 = vunpack.c.l.b16 %v103
  %v120 = vunpack.c.l.b16 %v104
  %v121 = vpack.c.b16 %v118, %v117
  %v122 = vpack.c.b16 %v120, %v119
  %v126 = vsel %vm50, %v99, 0
  %128 = vmatprep.subr.bf16.mxu0 0
  %129 = vmatpush1.bf16.msra.mxu0 %v121
  %130 = vmatprep.subr.bf16.mxu0 0
  %131 = vmatpush1.bf16.msra.mxu0 %v122
  %132 = vmatprep.subr.bf16.mxu0 0
  %133 = vmatpush1.bf16.msra.mxu0 0
  %134 = vmatprep.subr.bf16.mxu0 0
  %135 = vmatpush1.bf16.msra.mxu0 0
  %136 = vmatprep.subr.bf16.mxu0 0
  %137 = vmatpush1.bf16.msra.mxu0 0
  %138 = vmatprep.subr.bf16.mxu0 0
  %139 = vmatpush1.bf16.msra.mxu0 0
  %140 = vmatprep.subr.bf16.mxu0 0
  %141 = vmatpush1.bf16.msra.mxu0 0
  %142 = vmatprep.subr.bf16.mxu0 0
  %143 = vmatpush1.bf16.msra.mxu0 0
  %144 = vmatprep.subr.bf16.mxu0 0
  %145 = vmatpush1.bf16.msra.mxu0 0
  %146 = vmatprep.subr.bf16.mxu0 0
  %147 = vmatpush1.bf16.msra.mxu0 0
  %148 = vmatprep.subr.bf16.mxu0 0
  %149 = vmatpush1.bf16.msra.mxu0 0
  %150 = vmatprep.subr.bf16.mxu0 0
  %151 = vmatpush1.bf16.msra.mxu0 0
  %152 = vmatprep.subr.bf16.mxu0 0
  %153 = vmatpush1.bf16.msra.mxu0 0
  %154 = vmatprep.subr.bf16.mxu0 0
  %155 = vmatpush1.bf16.msra.mxu0 0
  %156 = vmatprep.subr.bf16.mxu0 0
  %157 = vmatpush1.bf16.msra.mxu0 0
  %158 = vmatprep.subr.bf16.mxu0 0
  %159 = vmatpush1.bf16.msra.mxu0 0
  %160 = vmatprep.mubr.bf16.mxu0 0
  %161 = vmatmul.mubr.bf16.gmra.mrb[0].mxu0 %v126
  %v162 = vpop.f32.mrb[0].mxu0
  %v163 = vadd.f32 %v111, %v162
  %v164 = vpop.f32.mrb[0].mxu0
  %v165 = vpop.f32.mrb[0].mxu0
  %v166 = vadd.f32 %v111, %v165
  %v167 = vpop.f32.mrb[0].mxu0
  %168 = vdwg.mxu0
  %169 = vst.msk [vmem:[%s6] sm:$0xff] %vm50, %v163
  %170 = vst.msk [vmem:[%s6 + $0x8] sm:$0xff] %vm50, %v166
  %v171 = vld [vmem:[%s2] sm:$0xff]
  %v172 = vld [vmem:[%s2 + $0x8] sm:$0xff]
  %v173 = vpack.c.bf16 %v172, %v171
  %s174 = scalar_lea.vmem %s3, 32
  %v175 = vld [vmem:[%s174] sm:$0xf]
  %v176 = vld [vmem:[%s174 + $0x4] sm:$0xf]
  %v177 = vld [vmem:[%s174 + $0x8] sm:$0xf]
  %v178 = vld [vmem:[%s174 + $0xc] sm:$0xf]
  %s179 = scalar_lea.vmem %s4, 2
  %v180 = vld [vmem:[%s179] sm:$0x1]
  %v182 = vlaneseq
  %v183 = vshrl.u32 %v182, 7
  %v184 = vsub.s32 0, %v183
  %v185 = vrot.slane %v180, %v184
  %v191 = vunpack.c.l.b16 %v175
  %v192 = vunpack.c.l.b16 %v176
  %v193 = vunpack.c.l.b16 %v177
  %v194 = vunpack.c.l.b16 %v178
  %v195 = vpack.c.b16 %v192, %v191
  %v196 = vpack.c.b16 %v194, %v193
  %v200 = vsel %vm50, %v173, 0
  %202 = vmatprep.subr.bf16.mxu0 0
  %203 = vmatpush1.bf16.msra.mxu0 %v195
  %204 = vmatprep.subr.bf16.mxu0 0
  %205 = vmatpush1.bf16.msra.mxu0 %v196
  %206 = vmatprep.subr.bf16.mxu0 0
  %207 = vmatpush1.bf16.msra.mxu0 0
  %208 = vmatprep.subr.bf16.mxu0 0
  %209 = vmatpush1.bf16.msra.mxu0 0
  %210 = vmatprep.subr.bf16.mxu0 0
  %211 = vmatpush1.bf16.msra.mxu0 0
  %212 = vmatprep.subr.bf16.mxu0 0
  %213 = vmatpush1.bf16.msra.mxu0 0
  %214 = vmatprep.subr.bf16.mxu0 0
  %215 = vmatpush1.bf16.msra.mxu0 0
  %216 = vmatprep.subr.bf16.mxu0 0
  %217 = vmatpush1.bf16.msra.mxu0 0
  %218 = vmatprep.subr.bf16.mxu0 0
  %219 = vmatpush1.bf16.msra.mxu0 0
  %220 = vmatprep.subr.bf16.mxu0 0
  %221 = vmatpush1.bf16.msra.mxu0 0
  %222 = vmatprep.subr.bf16.mxu0 0
  %223 = vmatpush1.bf16.msra.mxu0 0
  %224 = vmatprep.subr.bf16.mxu0 0
  %225 = vmatpush1.bf16.msra.mxu0 0
  %226 = vmatprep.subr.bf16.mxu0 0
  %227 = vmatpush1.bf16.msra.mxu0 0
  %228 = vmatprep.subr.bf16.mxu0 0
  %229 = vmatpush1.bf16.msra.mxu0 0
  %230 = vmatprep.subr.bf16.mxu0 0
  %231 = vmatpush1.bf16.msra.mxu0 0
  %232 = vmatprep.subr.bf16.mxu0 0
  %233 = vmatpush1.bf16.msra.mxu0 0
  %234 = vmatprep.mubr.bf16.mxu0 0
  %235 = vmatmul.mubr.bf16.gmra.mrb[0].mxu0 %v200
  %v236 = vpop.f32.mrb[0].mxu0
  %v237 = vadd.f32 %v185, %v236
  %v238 = vpop.f32.mrb[0].mxu0
  %v239 = vpop.f32.mrb[0].mxu0
  %v240 = vadd.f32 %v185, %v239
  %v241 = vpop.f32.mrb[0].mxu0
  %242 = vdwg.mxu0
  %243 = vst.msk [vmem:[%s7] sm:$0xff] %vm50, %v237
  %244 = vst.msk [vmem:[%s7 + $0x8] sm:$0xff] %vm50, %v240
  // Predicated region
  $region22: #{mhatt_forward.3} parent=0 // pred_check
    _
  $region23: #{mhatt_forward.3} parent=0 // pred_check_branch
    %246 = sbr.rel (0) target = $region25
  $region24: #{mhatt_forward.3} parent=0 // pred_region
    _
  $region25: #{mhatt_forward.3} parent=0 // pred_fallthru
    _
  // Predicated region
  $region26: #{mhatt_forward.3} parent=0 // pred_check
    _
  $region27: #{mhatt_forward.3} parent=0 // pred_check_branch
    %248 = sbr.rel (0) target = $region29
  $region28: #{mhatt_forward.3} parent=0 // pred_region
    _
  $region29: #{mhatt_forward.3} parent=0 // pred_fallthru
    _
  // Predicated region
  $region30: #{mhatt_forward.3} parent=0 // pred_check
    _
  $region31: #{mhatt_forward.3} parent=0 // pred_check_branch
    %250 = sbr.rel (0) target = $region33
  $region32: #{mhatt_forward.3} parent=0 // pred_region
    _
  $region33: #{mhatt_forward.3} parent=0 // pred_fallthru
    _
  // Predicated region
  $region34: #{mhatt_forward.3} parent=0 // pred_check
    _
  $region35: #{mhatt_forward.3} parent=0 // pred_check_branch
    %252 = sbr.rel (0) target = $region37
  $region36: #{mhatt_forward.3} parent=0 // pred_region
    _
  $region37: #{mhatt_forward.3} parent=0 // pred_fallthru
    _
  // Predicated region
  $region38: #{mhatt_forward.3} parent=0 // pred_check
    _
  $region39: #{mhatt_forward.3} parent=0 // pred_check_branch
    %254 = sbr.rel (0) target = $region41
  $region40: #{mhatt_forward.3} parent=0 // pred_region
    _
  $region41: #{mhatt_forward.3} parent=0 // pred_fallthru
    _
  // Predicated region
  $region42: #{mhatt_forward.3} parent=0 // pred_check
    _
  $region43: #{mhatt_forward.3} parent=0 // pred_check_branch
    %256 = sbr.rel (0) target = $region45
  $region44: #{mhatt_forward.3} parent=0 // pred_region
    _
  $region45: #{mhatt_forward.3} parent=0 // pred_fallthru
    _

// kernel: mhatt_forward.4
$region0: #{mhatt_forward.4}
  #allocation0 [shape = 'u32[]', space=smem, size = 0x4, offset = 0x4, fixed_abs, tag = 'smem constant byte address 0x4 - core index']
  #allocation1 [shape = 'u32[144,128]{1,0:T(1,128)}', space=vmem, size = 0x12000, scoped, tag = 'internal scratch']
  %s0 = inlined_call_operand.vmem [shape: f32[2,8,32], index: 0, kind: input, shape index: {}]
  %s1 = inlined_call_operand.vmem [shape: f32[2,8,32], index: 1, kind: input, shape index: {}]
  %s2 = inlined_call_operand.vmem [shape: f32[2,8,32], index: 2, kind: input, shape index: {}]
  %s3 = inlined_call_operand.vmem [shape: f32[2,1,8], index: 3, kind: input, shape index: {}]
  %s4 = inlined_call_operand.vmem [shape: f32[2,8,32], index: 4, kind: output, shape index: {}]
  %s5 = sld [smem:[#allocation0]]
  $region49: #{mhatt_forward.4} parent=0
    _
  %s7 = ssub.s32 1, %s5
  %s8 = scalar_select 0, %s7, %s5
  loop: start=0, step=1, limit=4
  $region2: #{mhatt_forward.4} parent=0 // loop_pre_header
    _
  $region3: #{mhatt_forward.4} parent=0 // loop_header
    %s10 = sphi 0, %s14
    %p11 = scmp.ge.s32.totalorder %s10, 4
    %s20 = sphi 0, %s22
    %s23 = sphi 0, %s20
    %s24 = sphi 0, %s23
    %s40 = sphi 0, %s24
    %s46 = sphi 0, %s48
    %s49 = sphi 0, %s46
    %s50 = sphi 0, %s49
    %s66 = sphi 0, %s50
    %s72 = sphi 0, %s74
    %s75 = sphi 0, %s72
    %s76 = sphi 0, %s75
    %s92 = sphi 0, %s76
    %s98 = sphi 0, %s100
    %s101 = sphi 0, %s98
    %s102 = sphi 0, %s101
    %s118 = sphi 0, %s102
    %s124 = sphi 0, %s126
    %s127 = sphi 0, %s124
    %s128 = sphi 0, %s127
    %s144 = sphi 0, %s128
  $region4: #{mhatt_forward.4} parent=0 // loop_header_branch
    %13 = sbr.rel (%p11) target = $region8
  $region5: #{mhatt_forward.4} parent=0 // loop_body
    %s15 = ssub.s32 %s10, 1
    %s16 = ssub.s32 %s10, 2
    %s17 = sadd.s32 %s10, 1
    %s18 = ssub.s32 %s10, %s17
    %p19 = scmp.eq.s32.totalorder %s18, 0
    %s21 = sadd.s32 %s20, 1
    %s22 = scalar_select %p19, %s20, %s21
    %p25 = pneg %p19
    %p26 = scmp.eq.s32.totalorder %s10, 1
    %p27 = por %p25, %p26
    %p28 = scmp.ne.s32.totalorder %s20, %s23
    %p29 = scmp.eq.s32.totalorder %s10, 0
    %p30 = por %p28, %p29
    %p31 = scmp.ne.s32.totalorder %s20, %s23
    %p32 = scmp.eq.s32.totalorder %s15, 1
    %p33 = por %p31, %p32
    %p34 = scmp.ne.s32.totalorder %s23, %s24
    %p35 = scmp.eq.s32.totalorder %s15, 0
    %p36 = por %p34, %p35
    %p37 = scmp.ne.s32.totalorder %s23, %s24
    %p38 = scmp.eq.s32.totalorder %s16, 1
    %p39 = por %p37, %p38
    %p41 = scmp.ne.s32.totalorder %s24, %s40
    %p42 = scmp.eq.s32.totalorder %s16, 0
    %p43 = por %p41, %p42
    %s44 = ssub.s32 %s10, %s17
    %p45 = scmp.eq.s32.totalorder %s44, 0
    %s47 = sadd.s32 %s46, 1
    %s48 = scalar_select %p45, %s46, %s47
    %p51 = pneg %p45
    %p52 = scmp.eq.s32.totalorder %s10, 1
    %p53 = por %p51, %p52
    %p54 = scmp.ne.s32.totalorder %s46, %s49
    %p55 = scmp.eq.s32.totalorder %s10, 0
    %p56 = por %p54, %p55
    %p57 = scmp.ne.s32.totalorder %s46, %s49
    %p58 = scmp.eq.s32.totalorder %s15, 1
    %p59 = por %p57, %p58
    %p60 = scmp.ne.s32.totalorder %s49, %s50
    %p61 = scmp.eq.s32.totalorder %s15, 0
    %p62 = por %p60, %p61
    %p63 = scmp.ne.s32.totalorder %s49, %s50
    %p64 = scmp.eq.s32.totalorder %s16, 1
    %p65 = por %p63, %p64
    %p67 = scmp.ne.s32.totalorder %s50, %s66
    %p68 = scmp.eq.s32.totalorder %s16, 0
    %p69 = por %p67, %p68
    %s70 = ssub.s32 %s10, %s17
    %p71 = scmp.eq.s32.totalorder %s70, 0
    %s73 = sadd.s32 %s72, 1
    %s74 = scalar_select %p71, %s72, %s73
    %p77 = pneg %p71
    %p78 = scmp.eq.s32.totalorder %s10, 1
    %p79 = por %p77, %p78
    %p80 = scmp.ne.s32.totalorder %s72, %s75
    %p81 = scmp.eq.s32.totalorder %s10, 0
    %p82 = por %p80, %p81
    %p83 = scmp.ne.s32.totalorder %s72, %s75
    %p84 = scmp.eq.s32.totalorder %s15, 1
    %p85 = por %p83, %p84
    %p86 = scmp.ne.s32.totalorder %s75, %s76
    %p87 = scmp.eq.s32.totalorder %s15, 0
    %p88 = por %p86, %p87
    %p89 = scmp.ne.s32.totalorder %s75, %s76
    %p90 = scmp.eq.s32.totalorder %s16, 1
    %p91 = por %p89, %p90
    %p93 = scmp.ne.s32.totalorder %s76, %s92
    %p94 = scmp.eq.s32.totalorder %s16, 0
    %p95 = por %p93, %p94
    %s96 = ssub.s32 %s10, %s17
    %p97 = scmp.eq.s32.totalorder %s96, 0
    %s99 = sadd.s32 %s98, 1
    %s100 = scalar_select %p97, %s98, %s99
    %p103 = pneg %p97
    %p104 = scmp.eq.s32.totalorder %s10, 1
    %p105 = por %p103, %p104
    %p106 = scmp.ne.s32.totalorder %s98, %s101
    %p107 = scmp.eq.s32.totalorder %s10, 0
    %p108 = por %p106, %p107
    %p109 = scmp.ne.s32.totalorder %s98, %s101
    %p110 = scmp.eq.s32.totalorder %s15, 1
    %p111 = por %p109, %p110
    %p112 = scmp.ne.s32.totalorder %s101, %s102
    %p113 = scmp.eq.s32.totalorder %s15, 0
    %p114 = por %p112, %p113
    %p115 = scmp.ne.s32.totalorder %s101, %s102
    %p116 = scmp.eq.s32.totalorder %s16, 1
    %p117 = por %p115, %p116
    %p119 = scmp.ne.s32.totalorder %s102, %s118
    %p120 = scmp.eq.s32.totalorder %s16, 0
    %p121 = por %p119, %p120
    %s122 = ssub.s32 %s10, %s17
    %p123 = scmp.eq.s32.totalorder %s122, 0
    %s125 = sadd.s32 %s124, 1
    %s126 = scalar_select %p123, %s124, %s125
    %p129 = pneg %p123
    %p130 = scmp.eq.s32.totalorder %s10, 1
    %p131 = por %p129, %p130
    %p132 = scmp.ne.s32.totalorder %s124, %s127
    %p133 = scmp.eq.s32.totalorder %s10, 0
    %p134 = por %p132, %p133
    %p135 = scmp.ne.s32.totalorder %s124, %s127
    %p136 = scmp.eq.s32.totalorder %s15, 1
    %p137 = por %p135, %p136
    %p138 = scmp.ne.s32.totalorder %s127, %s128
    %p139 = scmp.eq.s32.totalorder %s15, 0
    %p140 = por %p138, %p139
    %p141 = scmp.ne.s32.totalorder %s127, %s128
    %p142 = scmp.eq.s32.totalorder %s16, 1
    %p143 = por %p141, %p142
    %p145 = scmp.ne.s32.totalorder %s128, %s144
    %p146 = scmp.eq.s32.totalorder %s16, 0
    %p147 = por %p145, %p146
    %p148 = scmp.le.s32.totalorder 1, %s10
    %p149 = scmp.lt.s32.totalorder %s10, 3
    %p150 = pnand %p148, %p149
    %p151 = pneg %p150
    // Predicated region
    $region9: #{mhatt_forward.4} parent=5 // pred_check
      _
    $region10: #{mhatt_forward.4} parent=5 // pred_check_branch
      %153 = sbr.rel (%p150) target = $region12
    $region11: #{mhatt_forward.4} parent=5 // pred_region
      %s154 = ssub.s32 %s10, 1
    $region12: #{mhatt_forward.4} parent=5 // pred_fallthru
      _
    %p155 = scmp.lt.s32.totalorder %s10, 2
    // Predicated region
    $region13: #{mhatt_forward.4} parent=5 // pred_check
      %p156 = pneg %p155
    $region14: #{mhatt_forward.4} parent=5 // pred_check_branch
      %158 = sbr.rel (%p156) target = $region16
    $region15: #{mhatt_forward.4} parent=5 // pred_region
      // Predicated region
      $region17: #{mhatt_forward.4} parent=15 // pred_check
        %p159 = pneg %p30
      $region18: #{mhatt_forward.4} parent=15 // pred_check_branch
        %161 = sbr.rel (%p159) target = $region20
      $region19: #{mhatt_forward.4} parent=15 // pred_region
        %p162 = scmp.lt.s32.totalorder %s10, 1
        %s163 = scalar_select %p162, %s10, 1
        %s164 = smul.addr %s163, 8
        %s165 = scalar_lea.vmem %s0, %s164
      $region20: #{mhatt_forward.4} parent=15 // pred_fallthru
        _
      // Predicated region
      $region21: #{mhatt_forward.4} parent=15 // pred_check
        %p166 = pneg %p56
      $region22: #{mhatt_forward.4} parent=15 // pred_check_branch
        %168 = sbr.rel (%p166) target = $region24
      $region23: #{mhatt_forward.4} parent=15 // pred_region
        %p169 = scmp.lt.s32.totalorder %s10, 1
        %s170 = scalar_select %p169, %s10, 1
        %s171 = smul.addr %s170, 8
        %s172 = scalar_lea.vmem %s1, %s171
      $region24: #{mhatt_forward.4} parent=15 // pred_fallthru
        _
      // Predicated region
      $region25: #{mhatt_forward.4} parent=15 // pred_check
        %p173 = pneg %p82
      $region26: #{mhatt_forward.4} parent=15 // pred_check_branch
        %175 = sbr.rel (%p173) target = $region28
      $region27: #{mhatt_forward.4} parent=15 // pred_region
        %p176 = scmp.lt.s32.totalorder %s10, 1
        %s177 = scalar_select %p176, %s10, 1
        %s178 = smul.addr %s177, 8
        %s179 = scalar_lea.vmem %s2, %s178
      $region28: #{mhatt_forward.4} parent=15 // pred_fallthru
        _
      // Predicated region
      $region29: #{mhatt_forward.4} parent=15 // pred_check
        %p180 = pneg %p108
      $region30: #{mhatt_forward.4} parent=15 // pred_check_branch
        %182 = sbr.rel (%p180) target = $region32
      $region31: #{mhatt_forward.4} parent=15 // pred_region
        %p183 = scmp.lt.s32.totalorder %s10, 1
        %s184 = scalar_select %p183, %s10, 1
        %s185 = scalar_lea.vmem %s3, %s184
      $region32: #{mhatt_forward.4} parent=15 // pred_fallthru
        _
    $region16: #{mhatt_forward.4} parent=5 // pred_fallthru
      _
    %p186 = scmp.le.s32.totalorder 1, %s10
    %p187 = scmp.lt.s32.totalorder %s10, 3
    %p188 = pnand %p186, %p187
    %p189 = pneg %p188
    // Predicated region
    $region33: #{mhatt_forward.4} parent=5 // pred_check
      _
    $region34: #{mhatt_forward.4} parent=5 // pred_check_branch
      %191 = sbr.rel (%p188) target = $region36
    $region35: #{mhatt_forward.4} parent=5 // pred_region
      %s192 = ssub.s32 %s10, 1
      %p193 = scmp.lt.s32.totalorder %s15, 1
      %s194 = scalar_select %p193, %s15, 1
      %s195 = smul.addr %s194, 8
      %s196 = scalar_lea.vmem %s0, %s195
      %p197 = pneg %p36
      %p198 = pneg %p33
      %p199 = scmp.lt.s32.totalorder %s15, 1
      %s200 = scalar_select %p199, %s15, 1
      %s201 = smul.addr %s200, 8
      %s202 = scalar_lea.vmem %s1, %s201
      %p203 = pneg %p62
      %p204 = pneg %p59
      %p205 = scmp.lt.s32.totalorder %s15, 1
      %s206 = scalar_select %p205, %s15, 1
      %s207 = smul.addr %s206, 8
      %s208 = scalar_lea.vmem %s2, %s207
      %p209 = pneg %p88
      %p210 = pneg %p85
      %p211 = scmp.lt.s32.totalorder %s15, 1
      %s212 = scalar_select %p211, %s15, 1
      %s213 = scalar_lea.vmem %s3, %s212
      %p214 = pneg %p114
      %p215 = pneg %p111
      %p216 = pneg %p140
      %p217 = pneg %p137
      %p218 = scmp.lt.s32.totalorder %s15, 1
      %s219 = scalar_select %p218, %s15, 1
      %s220 = smul.addr %s219, 8
      %s221 = scalar_lea.vmem %s4, %s220
      %p222 = scmp.lt.s32.totalorder %s15, 1
      %s223 = scalar_select %p222, %s15, 1
      %s224 = smul.addr %s223, 8
      %s225 = scalar_lea.vmem %s0, %s224
      %p226 = scmp.lt.s32.totalorder %s15, 1
      %s227 = scalar_select %p226, %s15, 1
      %s228 = smul.addr %s227, 8
      %s229 = scalar_lea.vmem %s1, %s228
      %p230 = scmp.lt.s32.totalorder %s15, 1
      %s231 = scalar_select %p230, %s15, 1
      %s232 = smul.addr %s231, 8
      %s233 = scalar_lea.vmem %s2, %s232
      %p234 = scmp.lt.s32.totalorder %s15, 1
      %s235 = scalar_select %p234, %s15, 1
      %s236 = scalar_lea.vmem %s3, %s235
      %p237 = scmp.lt.s32.totalorder %s15, 1
      %s238 = scalar_select %p237, %s15, 1
      %s239 = smul.addr %s238, 8
      %s240 = scalar_lea.vmem %s4, %s239
      %v242 = vld [vmem:[%s236] sm:$0x1]
      %v243 = vld [vmem:[%s225] sm:$0xff]
      %v244 = vpack.c.bf16 %v243, %v243
      %v245 = vld [vmem:[%s229] sm:$0xff]
      %v246 = vpack.c.bf16 %v245, %v245
      %v247 = vld [vmem:[%s233] sm:$0xff]
      %v248 = vpack.c.bf16 %v247, %v247
      %vm249 = vcmask 64512
      %v251 = vsel %vm249, %v244, 0
      %v254 = vsel %vm249, %v246, 0
      %256 = vmatprep.subr.bf16.mxu0 0
      %257 = vmatpush1.bf16.xpose.msra.mxu0 %v254
      %258 = vmatprep.subr.bf16.mxu0 0
      %259 = vmatpush1.bf16.xpose.msra.mxu0 0
      %260 = vmatprep.subr.bf16.mxu0 0
      %261 = vmatpush1.bf16.xpose.msra.mxu0 0
      %262 = vmatprep.subr.bf16.mxu0 0
      %263 = vmatpush1.bf16.xpose.msra.mxu0 0
      %264 = vmatprep.subr.bf16.mxu0 0
      %265 = vmatpush1.bf16.xpose.msra.mxu0 0
      %266 = vmatprep.subr.bf16.mxu0 0
      %267 = vmatpush1.bf16.xpose.msra.mxu0 0
      %268 = vmatprep.subr.bf16.mxu0 0
      %269 = vmatpush1.bf16.xpose.msra.mxu0 0
      %270 = vmatprep.subr.bf16.mxu0 0
      %271 = vmatpush1.bf16.xpose.msra.mxu0 0
      %272 = vmatprep.subr.bf16.mxu0 0
      %273 = vmatpush1.bf16.xpose.msra.mxu0 0
      %274 = vmatprep.subr.bf16.mxu0 0
      %275 = vmatpush1.bf16.xpose.msra.mxu0 0
      %276 = vmatprep.subr.bf16.mxu0 0
      %277 = vmatpush1.bf16.xpose.msra.mxu0 0
      %278 = vmatprep.subr.bf16.mxu0 0
      %279 = vmatpush1.bf16.xpose.msra.mxu0 0
      %280 = vmatprep.subr.bf16.mxu0 0
      %281 = vmatpush1.bf16.xpose.msra.mxu0 0
      %282 = vmatprep.subr.bf16.mxu0 0
      %283 = vmatpush1.bf16.xpose.msra.mxu0 0
      %284 = vmatprep.subr.bf16.mxu0 0
      %285 = vmatpush1.bf16.xpose.msra.mxu0 0
      %286 = vmatprep.subr.bf16.mxu0 0
      %287 = vmatpush1.bf16.xpose.msra.mxu0 0
      %288 = vmatprep.mubr.bf16.mxu0 0
      %289 = vmatmul.mubr.bf16.gmra.mrb[0].mxu0 %v251
      %v290 = vpop.f32.mrb[0].mxu0
      %v291 = vadd.f32 0.0, %v290
      %v292 = vpop.f32.mrb[0].mxu0
      %v293 = vpop.f32.mrb[0].mxu0
      %v294 = vpop.f32.mrb[0].mxu0
      %295 = vdwg.mxu0
      %v296 = vmul.f32 %v291, 0.35355338
      %v298 = vlaneseq
      %v299 = vshrl.u32 %v298, 7
      %v300 = vsub.s32 0, %v299
      %v301 = vrot.slane %v242, %v300
      %v303 = vadd.f32 %v296, %v301
      %v304 = vsel %vm249, %v303, -inf
      %305 = vmax.xlane.f32.xlu0 %v304
      %v306 = vpop.xlane.xlu0 %305
      %v307 = vsub.f32 %v303, %v306
      %v308 = vmul.f32 %v307, 1.442695
      %v309 = vpow.pop %v308
      %v310 = vsel %vm249, %v309, 0.0
      %311 = vadd.xlane.f32.xlu0 %v310
      %v312 = vpop.xlane.xlu0 %311
      %v313 = vrcp.pop %v312
      %v314 = vmul.f32 %v309, %v313
      %v315 = vpack.c.bf16 %v314, %v314
      %v317 = vsel %vm249, %v315, 0
      %vm319 = vcmask 1043456
      %v321 = vsel %vm319, %v248, 0
      %323 = vmatprep.subr.bf16.mxu0 0
      %324 = vmatpush1.bf16.msra.mxu0 %v321
      %325 = vmatprep.subr.bf16.mxu0 0
      %326 = vmatpush1.bf16.msra.mxu0 0
      %327 = vmatprep.subr.bf16.mxu0 0
      %328 = vmatpush1.bf16.msra.mxu0 0
      %329 = vmatprep.subr.bf16.mxu0 0
      %330 = vmatpush1.bf16.msra.mxu0 0
      %331 = vmatprep.subr.bf16.mxu0 0
      %332 = vmatpush1.bf16.msra.mxu0 0
      %333 = vmatprep.subr.bf16.mxu0 0
      %334 = vmatpush1.bf16.msra.mxu0 0
      %335 = vmatprep.subr.bf16.mxu0 0
      %336 = vmatpush1.bf16.msra.mxu0 0
      %337 = vmatprep.subr.bf16.mxu0 0
      %338 = vmatpush1.bf16.msra.mxu0 0
      %339 = vmatprep.subr.bf16.mxu0 0
      %340 = vmatpush1.bf16.msra.mxu0 0
      %341 = vmatprep.subr.bf16.mxu0 0
      %342 = vmatpush1.bf16.msra.mxu0 0
      %343 = vmatprep.subr.bf16.mxu0 0
      %344 = vmatpush1.bf16.msra.mxu0 0
      %345 = vmatprep.subr.bf16.mxu0 0
      %346 = vmatpush1.bf16.msra.mxu0 0
      %347 = vmatprep.subr.bf16.mxu0 0
      %348 = vmatpush1.bf16.msra.mxu0 0
      %349 = vmatprep.subr.bf16.mxu0 0
      %350 = vmatpush1.bf16.msra.mxu0 0
      %351 = vmatprep.subr.bf16.mxu0 0
      %352 = vmatpush1.bf16.msra.mxu0 0
      %353 = vmatprep.subr.bf16.mxu0 0
      %354 = vmatpush1.bf16.msra.mxu0 0
      %355 = vmatprep.mubr.bf16.mxu0 0
      %356 = vmatmul.mubr.bf16.gmra.mrb[0].mxu0 %v317
      %v357 = vpop.f32.mrb[0].mxu0
      %v358 = vadd.f32 0.0, %v357
      %v359 = vpop.f32.mrb[0].mxu0
      %v360 = vpop.f32.mrb[0].mxu0
      %v361 = vpop.f32.mrb[0].mxu0
      %362 = vdwg.mxu0
      %364 = vrot.lane.b32.xlu0 %v244, 120
      %v365 = vpop.permute.xlu0 %364
      %367 = vrot.lane.b32.xlu0 %v246, 120
      %v368 = vpop.permute.xlu0 %367
      %v370 = vsel %vm249, %v365, 0
      %v373 = vsel %vm249, %v368, 0
      %375 = vmatprep.subr.bf16.mxu0 0
      %376 = vmatpush1.bf16.xpose.msra.mxu0 %v373
      %377 = vmatprep.subr.bf16.mxu0 0
      %378 = vmatpush1.bf16.xpose.msra.mxu0 0
      %379 = vmatprep.subr.bf16.mxu0 0
      %380 = vmatpush1.bf16.xpose.msra.mxu0 0
      %381 = vmatprep.subr.bf16.mxu0 0
      %382 = vmatpush1.bf16.xpose.msra.mxu0 0
      %383 = vmatprep.subr.bf16.mxu0 0
      %384 = vmatpush1.bf16.xpose.msra.mxu0 0
      %385 = vmatprep.subr.bf16.mxu0 0
      %386 = vmatpush1.bf16.xpose.msra.mxu0 0
      %387 = vmatprep.subr.bf16.mxu0 0
      %388 = vmatpush1.bf16.xpose.msra.mxu0 0
      %389 = vmatprep.subr.bf16.mxu0 0
      %390 = vmatpush1.bf16.xpose.msra.mxu0 0
      %391 = vmatprep.subr.bf16.mxu0 0
      %392 = vmatpush1.bf16.xpose.msra.mxu0 0
      %393 = vmatprep.subr.bf16.mxu0 0
      %394 = vmatpush1.bf16.xpose.msra.mxu0 0
      %395 = vmatprep.subr.bf16.mxu0 0
      %396 = vmatpush1.bf16.xpose.msra.mxu0 0
      %397 = vmatprep.subr.bf16.mxu0 0
      %398 = vmatpush1.bf16.xpose.msra.mxu0 0
      %399 = vmatprep.subr.bf16.mxu0 0
      %400 = vmatpush1.bf16.xpose.msra.mxu0 0
      %401 = vmatprep.subr.bf16.mxu0 0
      %402 = vmatpush1.bf16.xpose.msra.mxu0 0
      %403 = vmatprep.subr.bf16.mxu0 0
      %404 = vmatpush1.bf16.xpose.msra.mxu0 0
      %405 = vmatprep.subr.bf16.mxu0 0
      %406 = vmatpush1.bf16.xpose.msra.mxu0 0
      %407 = vmatprep.mubr.bf16.mxu0 0
      %408 = vmatmul.mubr.bf16.gmra.mrb[0].mxu0 %v370
      %v409 = vpop.f32.mrb[0].mxu0
      %v410 = vadd.f32 0.0, %v409
      %v411 = vpop.f32.mrb[0].mxu0
      %v412 = vpop.f32.mrb[0].mxu0
      %v413 = vpop.f32.mrb[0].mxu0
      %414 = vdwg.mxu0
      %v415 = vmul.f32 %v410, 0.35355338
      %v416 = vadd.f32 %v415, %v301
      %v417 = vsel %vm249, %v416, -inf
      %418 = vmax.xlane.f32.xlu0 %v417
      %v419 = vpop.xlane.xlu0 %418
      %v420 = vsub.f32 %v416, %v419
      %v421 = vmul.f32 %v420, 1.442695
      %v422 = vpow.pop %v421
      %v423 = vsel %vm249, %v422, 0.0
      %424 = vadd.xlane.f32.xlu0 %v423
      %v425 = vpop.xlane.xlu0 %424
      %v426 = vrcp.pop %v425
      %v427 = vmul.f32 %v422, %v426
      %v428 = vpack.c.bf16 %v427, %v427
      %430 = vrot.lane.b32.xlu0 %v248, 120
      %v431 = vpop.permute.xlu0 %430
      %v433 = vsel %vm249, %v428, 0
      %v436 = vsel %vm319, %v431, 0
      %438 = vmatprep.subr.bf16.mxu0 0
      %439 = vmatpush1.bf16.msra.mxu0 %v436
      %440 = vmatprep.subr.bf16.mxu0 0
      %441 = vmatpush1.bf16.msra.mxu0 0
      %442 = vmatprep.subr.bf16.mxu0 0
      %443 = vmatpush1.bf16.msra.mxu0 0
      %444 = vmatprep.subr.bf16.mxu0 0
      %445 = vmatpush1.bf16.msra.mxu0 0
      %446 = vmatprep.subr.bf16.mxu0 0
      %447 = vmatpush1.bf16.msra.mxu0 0
      %448 = vmatprep.subr.bf16.mxu0 0
      %449 = vmatpush1.bf16.msra.mxu0 0
      %450 = vmatprep.subr.bf16.mxu0 0
      %451 = vmatpush1.bf16.msra.mxu0 0
      %452 = vmatprep.subr.bf16.mxu0 0
      %453 = vmatpush1.bf16.msra.mxu0 0
      %454 = vmatprep.subr.bf16.mxu0 0
      %455 = vmatpush1.bf16.msra.mxu0 0
      %456 = vmatprep.subr.bf16.mxu0 0
      %457 = vmatpush1.bf16.msra.mxu0 0
      %458 = vmatprep.subr.bf16.mxu0 0
      %459 = vmatpush1.bf16.msra.mxu0 0
      %460 = vmatprep.subr.bf16.mxu0 0
      %461 = vmatpush1.bf16.msra.mxu0 0
      %462 = vmatprep.subr.bf16.mxu0 0
      %463 = vmatpush1.bf16.msra.mxu0 0
      %464 = vmatprep.subr.bf16.mxu0 0
      %465 = vmatpush1.bf16.msra.mxu0 0
      %466 = vmatprep.subr.bf16.mxu0 0
      %467 = vmatpush1.bf16.msra.mxu0 0
      %468 = vmatprep.subr.bf16.mxu0 0
      %469 = vmatpush1.bf16.msra.mxu0 0
      %470 = vmatprep.mubr.bf16.mxu0 0
      %471 = vmatmul.mubr.bf16.gmra.mrb[0].mxu0 %v433
      %v472 = vpop.f32.mrb[0].mxu0
      %v473 = vadd.f32 0.0, %v472
      %v474 = vpop.f32.mrb[0].mxu0
      %v475 = vpop.f32.mrb[0].mxu0
      %v476 = vpop.f32.mrb[0].mxu0
      %477 = vdwg.mxu0
      %478 = vrot.lane.b32.xlu0 %v244, 112
      %v479 = vpop.permute.xlu0 %478
      %480 = vrot.lane.b32.xlu0 %v246, 112
      %v481 = vpop.permute.xlu0 %480
      %v483 = vsel %vm249, %v479, 0
      %v486 = vsel %vm249, %v481, 0
      %488 = vmatprep.subr.bf16.mxu0 0
      %489 = vmatpush1.bf16.xpose.msra.mxu0 %v486
      %490 = vmatprep.subr.bf16.mxu0 0
      %491 = vmatpush1.bf16.xpose.msra.mxu0 0
      %492 = vmatprep.subr.bf16.mxu0 0
      %493 = vmatpush1.bf16.xpose.msra.mxu0 0
      %494 = vmatprep.subr.bf16.mxu0 0
      %495 = vmatpush1.bf16.xpose.msra.mxu0 0
      %496 = vmatprep.subr.bf16.mxu0 0
      %497 = vmatpush1.bf16.xpose.msra.mxu0 0
      %498 = vmatprep.subr.bf16.mxu0 0
      %499 = vmatpush1.bf16.xpose.msra.mxu0 0
      %500 = vmatprep.subr.bf16.mxu0 0
      %501 = vmatpush1.bf16.xpose.msra.mxu0 0
      %502 = vmatprep.subr.bf16.mxu0 0
      %503 = vmatpush1.bf16.xpose.msra.mxu0 0
      %504 = vmatprep.subr.bf16.mxu0 0
      %505 = vmatpush1.bf16.xpose.msra.mxu0 0
      %506 = vmatprep.subr.bf16.mxu0 0
      %507 = vmatpush1.bf16.xpose.msra.mxu0 0
      %508 = vmatprep.subr.bf16.mxu0 0
      %509 = vmatpush1.bf16.xpose.msra.mxu0 0
      %510 = vmatprep.subr.bf16.mxu0 0
      %511 = vmatpush1.bf16.xpose.msra.mxu0 0
      %512 = vmatprep.subr.bf16.mxu0 0
      %513 = vmatpush1.bf16.xpose.msra.mxu0 0
      %514 = vmatprep.subr.bf16.mxu0 0
      %515 = vmatpush1.bf16.xpose.msra.mxu0 0
      %516 = vmatprep.subr.bf16.mxu0 0
      %517 = vmatpush1.bf16.xpose.msra.mxu0 0
      %518 = vmatprep.subr.bf16.mxu0 0
      %519 = vmatpush1.bf16.xpose.msra.mxu0 0
      %520 = vmatprep.mubr.bf16.mxu0 0
      %521 = vmatmul.mubr.bf16.gmra.mrb[0].mxu0 %v483
      %v522 = vpop.f32.mrb[0].mxu0
      %v523 = vadd.f32 0.0, %v522
      %v524 = vpop.f32.mrb[0].mxu0
      %v525 = vpop.f32.mrb[0].mxu0
      %v526 = vpop.f32.mrb[0].mxu0
      %527 = vdwg.mxu0
      %v528 = vmul.f32 %v523, 0.35355338
      %v529 = vadd.f32 %v528, %v301
      %v530 = vsel %vm249, %v529, -inf
      %531 = vmax.xlane.f32.xlu0 %v530
      %v532 = vpop.xlane.xlu0 %531
      %v533 = vsub.f32 %v529, %v532
      %v534 = vmul.f32 %v533, 1.442695
      %v535 = vpow.pop %v534
      %v536 = vsel %vm249, %v535, 0.0
      %537 = vadd.xlane.f32.xlu0 %v536
      %v538 = vpop.xlane.xlu0 %537
      %v539 = vrcp.pop %v538
      %v540 = vmul.f32 %v535, %v539
      %v541 = vpack.c.bf16 %v540, %v540
      %542 = vrot.lane.b32.xlu0 %v248, 112
      %v543 = vpop.permute.xlu0 %542
      %v545 = vsel %vm249, %v541, 0
      %v548 = vsel %vm319, %v543, 0
      %550 = vmatprep.subr.bf16.mxu0 0
      %551 = vmatpush1.bf16.msra.mxu0 %v548
      %552 = vmatprep.subr.bf16.mxu0 0
      %553 = vmatpush1.bf16.msra.mxu0 0
      %554 = vmatprep.subr.bf16.mxu0 0
      %555 = vmatpush1.bf16.msra.mxu0 0
      %556 = vmatprep.subr.bf16.mxu0 0
      %557 = vmatpush1.bf16.msra.mxu0 0
      %558 = vmatprep.subr.bf16.mxu0 0
      %559 = vmatpush1.bf16.msra.mxu0 0
      %560 = vmatprep.subr.bf16.mxu0 0
      %561 = vmatpush1.bf16.msra.mxu0 0
      %562 = vmatprep.subr.bf16.mxu0 0
      %563 = vmatpush1.bf16.msra.mxu0 0
      %564 = vmatprep.subr.bf16.mxu0 0
      %565 = vmatpush1.bf16.msra.mxu0 0
      %566 = vmatprep.subr.bf16.mxu0 0
      %567 = vmatpush1.bf16.msra.mxu0 0
      %568 = vmatprep.subr.bf16.mxu0 0
      %569 = vmatpush1.bf16.msra.mxu0 0
      %570 = vmatprep.subr.bf16.mxu0 0
      %571 = vmatpush1.bf16.msra.mxu0 0
      %572 = vmatprep.subr.bf16.mxu0 0
      %573 = vmatpush1.bf16.msra.mxu0 0
      %574 = vmatprep.subr.bf16.mxu0 0
      %575 = vmatpush1.bf16.msra.mxu0 0
      %576 = vmatprep.subr.bf16.mxu0 0
      %577 = vmatpush1.bf16.msra.mxu0 0
      %578 = vmatprep.subr.bf16.mxu0 0
      %579 = vmatpush1.bf16.msra.mxu0 0
      %580 = vmatprep.subr.bf16.mxu0 0
      %581 = vmatpush1.bf16.msra.mxu0 0
      %582 = vmatprep.mubr.bf16.mxu0 0
      %583 = vmatmul.mubr.bf16.gmra.mrb[0].mxu0 %v545
      %v584 = vpop.f32.mrb[0].mxu0
      %v585 = vadd.f32 0.0, %v584
      %v586 = vpop.f32.mrb[0].mxu0
      %v587 = vpop.f32.mrb[0].mxu0
      %v588 = vpop.f32.mrb[0].mxu0
      %589 = vdwg.mxu0
      %590 = vrot.lane.b32.xlu0 %v244, 104
      %v591 = vpop.permute.xlu0 %590
      %592 = vrot.lane.b32.xlu0 %v246, 104
      %v593 = vpop.permute.xlu0 %592
      %v595 = vsel %vm249, %v591, 0
      %v598 = vsel %vm249, %v593, 0
      %600 = vmatprep.subr.bf16.mxu0 0
      %601 = vmatpush1.bf16.xpose.msra.mxu0 %v598
      %602 = vmatprep.subr.bf16.mxu0 0
      %603 = vmatpush1.bf16.xpose.msra.mxu0 0
      %604 = vmatprep.subr.bf16.mxu0 0
      %605 = vmatpush1.bf16.xpose.msra.mxu0 0
      %606 = vmatprep.subr.bf16.mxu0 0
      %607 = vmatpush1.bf16.xpose.msra.mxu0 0
      %608 = vmatprep.subr.bf16.mxu0 0
      %609 = vmatpush1.bf16.xpose.msra.mxu0 0
      %610 = vmatprep.subr.bf16.mxu0 0
      %611 = vmatpush1.bf16.xpose.msra.mxu0 0
      %612 = vmatprep.subr.bf16.mxu0 0
      %613 = vmatpush1.bf16.xpose.msra.mxu0 0
      %614 = vmatprep.subr.bf16.mxu0 0
      %615 = vmatpush1.bf16.xpose.msra.mxu0 0
      %616 = vmatprep.subr.bf16.mxu0 0
      %617 = vmatpush1.bf16.xpose.msra.mxu0 0
      %618 = vmatprep.subr.bf16.mxu0 0
      %619 = vmatpush1.bf16.xpose.msra.mxu0 0
      %620 = vmatprep.subr.bf16.mxu0 0
      %621 = vmatpush1.bf16.xpose.msra.mxu0 0
      %622 = vmatprep.subr.bf16.mxu0 0
      %623 = vmatpush1.bf16.xpose.msra.mxu0 0
      %624 = vmatprep.subr.bf16.mxu0 0
      %625 = vmatpush1.bf16.xpose.msra.mxu0 0
      %626 = vmatprep.subr.bf16.mxu0 0
      %627 = vmatpush1.bf16.xpose.msra.mxu0 0
      %628 = vmatprep.subr.bf16.mxu0 0
      %629 = vmatpush1.bf16.xpose.msra.mxu0 0
      %630 = vmatprep.subr.bf16.mxu0 0
      %631 = vmatpush1.bf16.xpose.msra.mxu0 0
      %632 = vmatprep.mubr.bf16.mxu0 0
      %633 = vmatmul.mubr.bf16.gmra.mrb[0].mxu0 %v595
      %v634 = vpop.f32.mrb[0].mxu0
      %v635 = vadd.f32 0.0, %v634
      %v636 = vpop.f32.mrb[0].mxu0
      %v637 = vpop.f32.mrb[0].mxu0
      %v638 = vpop.f32.mrb[0].mxu0
      %639 = vdwg.mxu0
      %v640 = vmul.f32 %v635, 0.35355338
      %v641 = vadd.f32 %v640, %v301
      %v642 = vsel %vm249, %v641, -inf
      %643 = vmax.xlane.f32.xlu0 %v642
      %v644 = vpop.xlane.xlu0 %643
      %v645 = vsub.f32 %v641, %v644
      %v646 = vmul.f32 %v645, 1.442695
      %v647 = vpow.pop %v646
      %v648 = vsel %vm249, %v647, 0.0
      %649 = vadd.xlane.f32.xlu0 %v648
      %v650 = vpop.xlane.xlu0 %649
      %v651 = vrcp.pop %v650
      %v652 = vmul.f32 %v647, %v651
      %v653 = vpack.c.bf16 %v652, %v652
      %654 = vrot.lane.b32.xlu0 %v248, 104
      %v655 = vpop.permute.xlu0 %654
      %v657 = vsel %vm249, %v653, 0
      %v660 = vsel %vm319, %v655, 0
      %662 = vmatprep.subr.bf16.mxu0 0
      %663 = vmatpush1.bf16.msra.mxu0 %v660
      %664 = vmatprep.subr.bf16.mxu0 0
      %665 = vmatpush1.bf16.msra.mxu0 0
      %666 = vmatprep.subr.bf16.mxu0 0
      %667 = vmatpush1.bf16.msra.mxu0 0
      %668 = vmatprep.subr.bf16.mxu0 0
      %669 = vmatpush1.bf16.msra.mxu0 0
      %670 = vmatprep.subr.bf16.mxu0 0
      %671 = vmatpush1.bf16.msra.mxu0 0
      %672 = vmatprep.subr.bf16.mxu0 0
      %673 = vmatpush1.bf16.msra.mxu0 0
      %674 = vmatprep.subr.bf16.mxu0 0
      %675 = vmatpush1.bf16.msra.mxu0 0
      %676 = vmatprep.subr.bf16.mxu0 0
      %677 = vmatpush1.bf16.msra.mxu0 0
      %678 = vmatprep.subr.bf16.mxu0 0
      %679 = vmatpush1.bf16.msra.mxu0 0
      %680 = vmatprep.subr.bf16.mxu0 0
      %681 = vmatpush1.bf16.msra.mxu0 0
      %682 = vmatprep.subr.bf16.mxu0 0
      %683 = vmatpush1.bf16.msra.mxu0 0
      %684 = vmatprep.subr.bf16.mxu0 0
      %685 = vmatpush1.bf16.msra.mxu0 0
      %686 = vmatprep.subr.bf16.mxu0 0
      %687 = vmatpush1.bf16.msra.mxu0 0
      %688 = vmatprep.subr.bf16.mxu0 0
      %689 = vmatpush1.bf16.msra.mxu0 0
      %690 = vmatprep.subr.bf16.mxu0 0
      %691 = vmatpush1.bf16.msra.mxu0 0
      %692 = vmatprep.subr.bf16.mxu0 0
      %693 = vmatpush1.bf16.msra.mxu0 0
      %694 = vmatprep.mubr.bf16.mxu0 0
      %695 = vmatmul.mubr.bf16.gmra.mrb[0].mxu0 %v657
      %v696 = vpop.f32.mrb[0].mxu0
      %v697 = vadd.f32 0.0, %v696
      %v698 = vpop.f32.mrb[0].mxu0
      %v699 = vpop.f32.mrb[0].mxu0
      %v700 = vpop.f32.mrb[0].mxu0
      %701 = vdwg.mxu0
      %703 = vrot.lane.b32.xlu0 %v473, 8
      %v704 = vpop.permute.xlu0 %703
      %707 = vrot.lane.b32.xlu0 %v585, 16
      %v708 = vpop.permute.xlu0 %707
      %711 = vrot.lane.b32.xlu0 %v697, 24
      %v712 = vpop.permute.xlu0 %711
      %v714 = vsel %vm249, %v358, %v704
      %vm715 = vcmask 130048
      %v716 = vsel %vm715, %v714, %v708
      %vm717 = vcmask 195584
      %v718 = vsel %vm717, %v716, %v712
      %vm719 = vcmask 261120
      %720 = vst.msk [vmem:[%s240] sm:$0xff] %vm719, %v718
      %p721 = scmp.lt.s32.totalorder %s15, 1
      %s722 = scalar_select %p721, %s15, 1
      %s723 = smul.addr %s722, 8
      %s724 = scalar_lea.vmem %s4, %s723
      // Predicated region
      $region37: #{mhatt_forward.4} parent=35 // pred_check
        %p725 = pneg %p137
      $region38: #{mhatt_forward.4} parent=35 // pred_check_branch
        %727 = sbr.rel (%p725) target = $region40
      $region39: #{mhatt_forward.4} parent=35 // pred_region
        _
      $region40: #{mhatt_forward.4} parent=35 // pred_fallthru
        _
    $region36: #{mhatt_forward.4} parent=5 // pred_fallthru
      _
    %p728 = scmp.le.s32.totalorder 2, %s10
    // Predicated region
    $region41: #{mhatt_forward.4} parent=5 // pred_check
      %p729 = pneg %p728
    $region42: #{mhatt_forward.4} parent=5 // pred_check_branch
      %731 = sbr.rel (%p729) target = $region44
    $region43: #{mhatt_forward.4} parent=5 // pred_region
      %s732 = ssub.s32 %s10, 2
      // Predicated region
      $region45: #{mhatt_forward.4} parent=43 // pred_check
        %p733 = pneg %p143
      $region46: #{mhatt_forward.4} parent=43 // pred_check_branch
        %735 = sbr.rel (%p733) target = $region48
      $region47: #{mhatt_forward.4} parent=43 // pred_region
        %p736 = scmp.lt.s32.totalorder %s16, 1
        %s737 = scalar_select %p736, %s16, 1
        %s738 = smul.addr %s737, 8
        %s739 = scalar_lea.vmem %s4, %s738
      $region48: #{mhatt_forward.4} parent=43 // pred_fallthru
        _
    $region44: #{mhatt_forward.4} parent=5 // pred_fallthru
      _
  $region6: #{mhatt_forward.4} parent=0 // loop_footer
    %s14 = sadd.s32 1, %s10
  $region7: #{mhatt_forward.4} parent=0 // loop_footer_branch
    %9 = sbr.rel target = $region3
  $region8: #{mhatt_forward.4} parent=0 // loop_exit
    _

</llo_original>
